<compile_context>
chip_gen: v7x
topology: tpu7x:2x2x1
jax: 0.10.0
libtpu: 0.0.40
codegen_flags: <defaults>
</compile_context>

<pallas_src>
import math
import functools

import jax
import jax.numpy as jnp
from jax.experimental import pallas as pl
from jax.experimental.pallas import tpu as pltpu


# ---------------------------------------------------------------------------
# Fused kernel
# ---------------------------------------------------------------------------

def _up_block2_kernel(emb_ref, x_ref, skip_ref, up_ref, mask_ref,
                      tw1_ref, tb1_ref, tw2_ref, tb2_ref,
                      upw_ref, upb_ref,
                      g1g_ref, g1b_ref, gm1_ref, c1w_ref, c1b_ref,
                      g2g_ref, g2b_ref, gm2_ref, c2w_ref, c2b_ref,
                      o_ref, *, H2, W2):
    f32 = jnp.float32
    HW2 = H2 * W2
    masks = mask_ref[...]                                     # (9, H2*W2) tap validity

    def conv3x3(xc, w_flat, b_col):
        """3x3 'same' conv on channel-major (C, H2*W2) data as one im2col matmul."""
        taps, k = [], 0
        for di in (-1, 0, 1):
            for dj in (-1, 0, 1):
                s = di * W2 + dj                              # flat-index shift of tap
                if s == 0:
                    taps.append(xc)                           # center tap: no mask needed
                else:
                    t = pltpu.roll(xc, shift=(-s) % HW2, axis=1)   # XLU lane rotate
                    taps.append(t * masks[k:k + 1, :])        # zero out-of-image taps
                k += 1
        patches = jnp.concatenate(taps, axis=0)               # (9*C, H2*W2)
        return jnp.dot(w_flat, patches, preferred_element_type=f32) + b_col

    def gn_silu(xc, gamma, beta, gmat):
        """GroupNorm (biased var, eps=1e-5) + SiLU on channel-major (C, M) data."""
        mu_c = jnp.mean(xc, axis=1, keepdims=True)            # per-channel mean
        ms_c = jnp.mean(xc * xc, axis=1, keepdims=True)       # per-channel E[x^2]
        mu_g = jnp.dot(gmat, mu_c, preferred_element_type=f32)    # group mean
        ms_g = jnp.dot(gmat, ms_c, preferred_element_type=f32)    # group E[x^2]
        var_g = jnp.maximum(ms_g - mu_g * mu_g, 0.0)
        y = (xc - mu_g) * (jax.lax.rsqrt(var_g + 1e-5) * gamma) + beta
        return y * jax.nn.sigmoid(y)                          # SiLU

    # ---- time MLP: Linear -> SiLU -> Linear (broadcast + reduce, fused) ----
    e_col = emb_ref[0].astype(f32)                            # (base, 1)
    h_row = jnp.sum(tw1_ref[...] * e_col, axis=0, keepdims=True) + tb1_ref[...]
    h_row = h_row * jax.nn.sigmoid(h_row)                     # (1, Cin)
    temb = jnp.sum(tw2_ref[...] * h_row, axis=1, keepdims=True) + tb2_ref[...]  # (Cin, 1)

    # ---- x + temb (low-res), nearest x2 upsample (one-hot matmul), ups. conv ----
    x = x_ref[0].astype(f32) + temb                           # (Cin, H*W)
    xup = jnp.dot(x, up_ref[...], preferred_element_type=f32)  # (Cin, H2*W2)
    u = conv3x3(xup, upw_ref[...], upb_ref[...])              # (Cin, H2*W2)

    # ---- concat skip on channels, residual block ----
    xc = jnp.concatenate([u, skip_ref[0].astype(f32)], axis=0)    # (2*Cin, H2*W2)
    h1 = gn_silu(xc, g1g_ref[...], g1b_ref[...], gm1_ref[...])
    out1 = conv3x3(h1, c1w_ref[...], c1b_ref[...])            # (Cout, H2*W2)
    h2 = gn_silu(out1, g2g_ref[...], g2b_ref[...], gm2_ref[...])
    out = conv3x3(h2, c2w_ref[...], c2b_ref[...]) + out1      # block2(out1) + out1

    o_ref[0] = out.astype(o_ref.dtype)                        # lane-dense (Cout, H2*W2)


# ---------------------------------------------------------------------------
# Constant helpers (one-hot upsample matrix, conv tap masks, group averaging)
# ---------------------------------------------------------------------------

def _upsample_matrix(H, W):
    """(H*W, 4*H*W) one-hot matrix: (C, H*W) @ U = nearest-x2 upsampled (C, 4*H*W)."""
    H2, W2 = 2 * H, 2 * W
    p = jnp.arange(H2 * W2)
    src = (p // W2 // 2) * W + (p % W2) // 2
    return (jnp.arange(H * W)[:, None] == src[None, :]).astype(jnp.float32)


def _tap_masks(H2, W2):
    """(9, H2*W2) validity masks for the 9 taps of a 3x3 'same' conv (flat spatial)."""
    p = jnp.arange(H2 * W2)
    i, j = p // W2, p % W2
    rows = []
    for di in (-1, 0, 1):
        for dj in (-1, 0, 1):
            rows.append((i + di >= 0) & (i + di < H2) & (j + dj >= 0) & (j + dj < W2))
    return jnp.stack(rows, axis=0).astype(jnp.float32)


def group_average_matrix(c, num_groups):
    cg = c // num_groups
    gid = jnp.arange(c) // cg
    return (gid[:, None] == gid[None, :]).astype(jnp.float32) / cg


# ---------------------------------------------------------------------------
# Parameters / forward pass
# ---------------------------------------------------------------------------

def init_params(key, in_ch, out_ch, base_channels, num_groups):
    ks = jax.random.split(key, 14)
    s = 0.1

    def conv_w(k, cin, cout):
        # PyTorch Conv2d weight is (Cout, Cin, 3, 3); we keep the MXU-friendly flat
        # layout w_flat[o, (ki*3+kj)*Cin + c] == w_torch[o, c, ki, kj]
        # (= w_torch.transpose(0, 2, 3, 1).reshape(Cout, 9*Cin)).
        return (jax.random.normal(k, (cout, 3, 3, cin), jnp.float32) * s
                ).reshape(cout, 9 * cin)

    return dict(
        # time MLP: t_w1 is Linear(base->in_ch).weight.T, t_w2 is Linear(in,in).weight
        t_w1=jax.random.normal(ks[0], (base_channels, in_ch), jnp.float32) * s,
        t_b1=jax.random.normal(ks[1], (1, in_ch), jnp.float32) * s,
        t_w2=jax.random.normal(ks[2], (in_ch, in_ch), jnp.float32) * s,
        t_b2=jax.random.normal(ks[3], (in_ch, 1), jnp.float32) * s,
        up_w=conv_w(ks[4], in_ch, in_ch),
        up_b=jax.random.normal(ks[5], (in_ch, 1), jnp.float32) * s,
        gn1_g=1.0 + jax.random.normal(ks[6], (2 * in_ch, 1), jnp.float32) * s,
        gn1_b=jax.random.normal(ks[7], (2 * in_ch, 1), jnp.float32) * s,
        c1_w=conv_w(ks[8], 2 * in_ch, out_ch),
        c1_b=jax.random.normal(ks[9], (out_ch, 1), jnp.float32) * s,
        gn2_g=1.0 + jax.random.normal(ks[10], (out_ch, 1), jnp.float32) * s,
        gn2_b=jax.random.normal(ks[11], (out_ch, 1), jnp.float32) * s,
        c2_w=conv_w(ks[12], out_ch, out_ch),
        c2_b=jax.random.normal(ks[13], (out_ch, 1), jnp.float32) * s,
        gmat1=group_average_matrix(2 * in_ch, num_groups),
        gmat2=group_average_matrix(out_ch, num_groups),
    )


def _const_spec(a):
    zeros = (0,) * a.ndim
    return pl.BlockSpec(a.shape, lambda i: zeros)


def up_block2_forward(params, x, x_skip, t, *, base_channels, time_emb_scale):
    """x: (N, in_ch, H, W), x_skip: (N, in_ch, 2H, 2W), t: (N,). Returns NCHW output."""
    N, Cin, H, W = x.shape
    H2, W2 = 2 * H, 2 * W
    Cout = params["c2_b"].shape[0]

    # Sinusoidal positional table: tiny (N, base) tensor computed in plain JAX.
    half = base_channels // 2
    freqs = jnp.exp(jnp.arange(half, dtype=jnp.float32) * (-math.log(10000.0) / half))
    ang = (t.astype(jnp.float32) * time_emb_scale)[:, None] * freqs[None, :]
    emb = jnp.concatenate([jnp.sin(ang), jnp.cos(ang)], axis=-1)[:, :, None]  # (N, base, 1)

    # NCHW tensors are only *viewed* flat (free reshapes); no layout transposes.
    x_flat = x.reshape(N, Cin, H * W).astype(jnp.float32)
    skip_flat = x_skip.reshape(N, Cin, H2 * W2).astype(jnp.float32)

    up_mat = _upsample_matrix(H, W)         # constants; folded by XLA under jit
    tap_mask = _tap_masks(H2, W2)

    const_args = (up_mat, tap_mask,
                  params["t_w1"], params["t_b1"], params["t_w2"], params["t_b2"],
                  params["up_w"], params["up_b"],
                  params["gn1_g"], params["gn1_b"], params["gmat1"],
                  params["c1_w"], params["c1_b"],
                  params["gn2_g"], params["gn2_b"], params["gmat2"],
                  params["c2_w"], params["c2_b"])

    in_specs = [
        pl.BlockSpec((1, base_channels, 1), lambda i: (i, 0, 0)),      # emb
        pl.BlockSpec((1, Cin, H * W), lambda i: (i, 0, 0)),            # x (NCHW-flat)
        pl.BlockSpec((1, Cin, H2 * W2), lambda i: (i, 0, 0)),          # skip (NCHW-flat)
    ] + [_const_spec(a) for a in const_args]                           # weights/constants

    kernel = functools.partial(_up_block2_kernel, H2=H2, W2=W2)

    out_flat = pl.pallas_call(
        kernel,
        out_shape=jax.ShapeDtypeStruct((N, Cout, H2 * W2), jnp.float32),
        grid=(N,),
        in_specs=in_specs,
        out_specs=pl.BlockSpec((1, Cout, H2 * W2), lambda i: (i, 0, 0)),
        compiler_params=pltpu.CompilerParams(dimension_semantics=("parallel",)),
    )(emb, x_flat, skip_flat, *const_args)

    return out_flat.reshape(N, Cout, H2, W2)                  # free split: already NCHW


# ---------------------------------------------------------------------------
# Pure-JAX reference (PyTorch semantics) for a correctness check
# ---------------------------------------------------------------------------

def _reference_forward(params, x, x_skip, t, *, base_channels, time_emb_scale,
                       num_groups):
    half = base_channels // 2
    freqs = jnp.exp(jnp.arange(half, dtype=jnp.float32) * (-math.log(10000.0) / half))
    ang = (t.astype(jnp.float32) * time_emb_scale)[:, None] * freqs[None, :]
    emb = jnp.concatenate([jnp.sin(ang), jnp.cos(ang)], axis=-1)
    h = emb @ params["t_w1"] + params["t_b1"]
    h = h * jax.nn.sigmoid(h)
    temb = h @ params["t_w2"].T + params["t_b2"][:, 0]

    def conv(z, w_flat, b_col):
        cout = w_flat.shape[0]
        cin = w_flat.shape[1] // 9
        w = w_flat.reshape(cout, 3, 3, cin).transpose(0, 3, 1, 2)   # OIHW
        y = jax.lax.conv_general_dilated(
            z, w, window_strides=(1, 1), padding=((1, 1), (1, 1)),
            dimension_numbers=("NCHW", "OIHW", "NCHW"))
        return y + b_col[:, 0][None, :, None, None]

    def gn_silu(z, g, b):
        n, c, hh, ww = z.shape
        zg = z.reshape(n, num_groups, c // num_groups, hh, ww)
        mu = zg.mean(axis=(2, 3, 4), keepdims=True)
        var = ((zg - mu) ** 2).mean(axis=(2, 3, 4), keepdims=True)
        zn = ((zg - mu) / jnp.sqrt(var + 1e-5)).reshape(n, c, hh, ww)
        y = zn * g[:, 0][None, :, None, None] + b[:, 0][None, :, None, None]
        return y * jax.nn.sigmoid(y)

    xx = x + temb[:, :, None, None]
    xx = jnp.repeat(jnp.repeat(xx, 2, axis=2), 2, axis=3)
    xx = conv(xx, params["up_w"], params["up_b"])
    xx = jnp.concatenate([xx, x_skip], axis=1)
    h1 = gn_silu(xx, params["gn1_g"], params["gn1_b"])
    out1 = conv(h1, params["c1_w"], params["c1_b"])
    h2 = gn_silu(out1, params["gn2_g"], params["gn2_b"])
    return conv(h2, params["c2_w"], params["c2_b"]) + out1


if __name__ == "__main__":
    in_ch, out_ch, base_channels = 8, 8, 8
    time_emb_scale, num_groups = 1.0, 2
    N, H, W = 2, 8, 8

    key = jax.random.PRNGKey(0)
    kx, ksk, kt, kp = jax.random.split(key, 4)
    x = jax.random.normal(kx, (N, in_ch, H, W), dtype=jnp.float32)
    x_skip = jax.random.normal(ksk, (N, in_ch, 2 * H, 2 * W), dtype=jnp.float32)
    t = jax.random.uniform(kt, (N,), dtype=jnp.float32, minval=0.0, maxval=100.0)
    params = init_params(kp, in_ch, out_ch, base_channels, num_groups)

    fwd = jax.jit(functools.partial(up_block2_forward,
                                    base_channels=base_channels,
                                    time_emb_scale=time_emb_scale))
    out = fwd(params, x, x_skip, t)
    jax.block_until_ready(out)

    assert out.shape == (N, out_ch, 2 * H, 2 * W)
    assert bool(jnp.all(jnp.isfinite(out)))

    ref = _reference_forward(params, x, x_skip, t,
                             base_channels=base_channels,
                             time_emb_scale=time_emb_scale,
                             num_groups=num_groups)
    err = float(jnp.max(jnp.abs(out - ref)))
    assert err < 5e-3, f"mismatch vs reference: max|diff|={err}"
    print("KERNEL_OK")
</pallas_src>

<mosaic_0001>
module attributes {stable_mosaic.version = 11 : i64} {
  func.func @_up_block2_kernel(%arg0: i32, %arg1: memref<1x8x1xf32, #tpu.memory_space<vmem>>, %arg2: memref<1x8x64xf32, #tpu.memory_space<vmem>>, %arg3: memref<1x8x256xf32, #tpu.memory_space<vmem>>, %arg4: memref<64x256xf32, #tpu.memory_space<vmem>>, %arg5: memref<9x256xf32, #tpu.memory_space<vmem>>, %arg6: memref<8x8xf32, #tpu.memory_space<vmem>>, %arg7: memref<1x8xf32, #tpu.memory_space<vmem>>, %arg8: memref<8x8xf32, #tpu.memory_space<vmem>>, %arg9: memref<8x1xf32, #tpu.memory_space<vmem>>, %arg10: memref<8x72xf32, #tpu.memory_space<vmem>>, %arg11: memref<8x1xf32, #tpu.memory_space<vmem>>, %arg12: memref<16x1xf32, #tpu.memory_space<vmem>>, %arg13: memref<16x1xf32, #tpu.memory_space<vmem>>, %arg14: memref<16x16xf32, #tpu.memory_space<vmem>>, %arg15: memref<8x144xf32, #tpu.memory_space<vmem>>, %arg16: memref<8x1xf32, #tpu.memory_space<vmem>>, %arg17: memref<8x1xf32, #tpu.memory_space<vmem>>, %arg18: memref<8x1xf32, #tpu.memory_space<vmem>>, %arg19: memref<8x8xf32, #tpu.memory_space<vmem>>, %arg20: memref<8x72xf32, #tpu.memory_space<vmem>>, %arg21: memref<8x1xf32, #tpu.memory_space<vmem>>, %arg22: memref<1x8x256xf32, #tpu.memory_space<vmem>>) attributes {dimension_semantics = [#tpu.dimension_semantics<parallel>], iteration_bounds = array<i64: 2>, scalar_prefetch = 0 : i64, scratch_operands = 0 : i64, tpu.core_type = #tpu.core_type<tc>, window_params = [{transform_indices = @transform_0, window_bounds = array<i64: 1, 8, 1>}, {transform_indices = @transform_1, window_bounds = array<i64: 1, 8, 64>}, {transform_indices = @transform_2, window_bounds = array<i64: 1, 8, 256>}, {pipeline_mode = #tpu.pipeline_mode<synchronous>, transform_indices = @transform_3, window_bounds = array<i64: 64, 256>}, {pipeline_mode = #tpu.pipeline_mode<synchronous>, transform_indices = @transform_4, window_bounds = array<i64: 9, 256>}, {pipeline_mode = #tpu.pipeline_mode<synchronous>, transform_indices = @transform_5, window_bounds = array<i64: 8, 8>}, {pipeline_mode = #tpu.pipeline_mode<synchronous>, transform_indices = @transform_6, window_bounds = array<i64: 1, 8>}, {pipeline_mode = #tpu.pipeline_mode<synchronous>, transform_indices = @transform_7, window_bounds = array<i64: 8, 8>}, {pipeline_mode = #tpu.pipeline_mode<synchronous>, transform_indices = @transform_8, window_bounds = array<i64: 8, 1>}, {pipeline_mode = #tpu.pipeline_mode<synchronous>, transform_indices = @transform_9, window_bounds = array<i64: 8, 72>}, {pipeline_mode = #tpu.pipeline_mode<synchronous>, transform_indices = @transform_10, window_bounds = array<i64: 8, 1>}, {pipeline_mode = #tpu.pipeline_mode<synchronous>, transform_indices = @transform_11, window_bounds = array<i64: 16, 1>}, {pipeline_mode = #tpu.pipeline_mode<synchronous>, transform_indices = @transform_12, window_bounds = array<i64: 16, 1>}, {pipeline_mode = #tpu.pipeline_mode<synchronous>, transform_indices = @transform_13, window_bounds = array<i64: 16, 16>}, {pipeline_mode = #tpu.pipeline_mode<synchronous>, transform_indices = @transform_14, window_bounds = array<i64: 8, 144>}, {pipeline_mode = #tpu.pipeline_mode<synchronous>, transform_indices = @transform_15, window_bounds = array<i64: 8, 1>}, {pipeline_mode = #tpu.pipeline_mode<synchronous>, transform_indices = @transform_16, window_bounds = array<i64: 8, 1>}, {pipeline_mode = #tpu.pipeline_mode<synchronous>, transform_indices = @transform_17, window_bounds = array<i64: 8, 1>}, {pipeline_mode = #tpu.pipeline_mode<synchronous>, transform_indices = @transform_18, window_bounds = array<i64: 8, 8>}, {pipeline_mode = #tpu.pipeline_mode<synchronous>, transform_indices = @transform_19, window_bounds = array<i64: 8, 72>}, {pipeline_mode = #tpu.pipeline_mode<synchronous>, transform_indices = @transform_20, window_bounds = array<i64: 8, 1>}, {transform_indices = @transform_21, window_bounds = array<i64: 1, 8, 256>}]} {
    %c0 = arith.constant 0 : index
    %c0_0 = arith.constant 0 : index
    %0 = vector.load %arg5[%c0, %c0_0] : memref<9x256xf32, #tpu.memory_space<vmem>>, vector<9x256xf32>
    %c0_1 = arith.constant 0 : index
    %c0_2 = arith.constant 0 : index
    %c0_3 = arith.constant 0 : index
    %1 = vector.load %arg1[%c0_1, %c0_2, %c0_3] : memref<1x8x1xf32, #tpu.memory_space<vmem>>, vector<1x8x1xf32>
    %2 = vector.shape_cast %1 : vector<1x8x1xf32> to vector<8x1xf32>
    %c0_4 = arith.constant 0 : index
    %c0_5 = arith.constant 0 : index
    %3 = vector.load %arg6[%c0_4, %c0_5] : memref<8x8xf32, #tpu.memory_space<vmem>>, vector<8x8xf32>
    %4 = vector.broadcast %2 : vector<8x1xf32> to vector<8x8xf32>
    %5 = arith.mulf %3, %4 : vector<8x8xf32>
    %cst = arith.constant dense<0.000000e+00> : vector<8xf32>
    %6 = vector.multi_reduction <add>, %5, %cst [0] : vector<8x8xf32> to vector<8xf32>
    %7 = vector.shape_cast %6 : vector<8xf32> to vector<1x8xf32>
    %c0_6 = arith.constant 0 : index
    %c0_7 = arith.constant 0 : index
    %8 = vector.load %arg7[%c0_6, %c0_7] : memref<1x8xf32, #tpu.memory_space<vmem>>, vector<1x8xf32>
    %9 = arith.addf %7, %8 : vector<1x8xf32>
    %10 = arith.negf %9 : vector<1x8xf32>
    %11 = math.exp %10 : vector<1x8xf32>
    %cst_8 = arith.constant 1.000000e+00 : f32
    %12 = vector.broadcast %cst_8 : f32 to vector<1x8xf32>
    %13 = arith.addf %12, %11 : vector<1x8xf32>
    %14 = arith.divf %12, %13 : vector<1x8xf32>
    %15 = arith.mulf %9, %14 : vector<1x8xf32>
    %c0_9 = arith.constant 0 : index
    %c0_10 = arith.constant 0 : index
    %16 = vector.load %arg8[%c0_9, %c0_10] : memref<8x8xf32, #tpu.memory_space<vmem>>, vector<8x8xf32>
    %17 = vector.broadcast %15 : vector<1x8xf32> to vector<8x8xf32>
    %18 = arith.mulf %16, %17 : vector<8x8xf32>
    %cst_11 = arith.constant dense<0.000000e+00> : vector<8xf32>
    %19 = vector.multi_reduction <add>, %18, %cst_11 [1] : vector<8x8xf32> to vector<8xf32>
    %20 = vector.shape_cast %19 : vector<8xf32> to vector<8x1xf32>
    %c0_12 = arith.constant 0 : index
    %c0_13 = arith.constant 0 : index
    %21 = vector.load %arg9[%c0_12, %c0_13] : memref<8x1xf32, #tpu.memory_space<vmem>>, vector<8x1xf32>
    %22 = arith.addf %20, %21 : vector<8x1xf32>
    %c0_14 = arith.constant 0 : index
    %c0_15 = arith.constant 0 : index
    %c0_16 = arith.constant 0 : index
    %23 = vector.load %arg2[%c0_14, %c0_15, %c0_16] : memref<1x8x64xf32, #tpu.memory_space<vmem>>, vector<1x8x64xf32>
    %24 = vector.shape_cast %23 : vector<1x8x64xf32> to vector<8x64xf32>
    %25 = vector.broadcast %22 : vector<8x1xf32> to vector<8x64xf32>
    %26 = arith.addf %24, %25 : vector<8x64xf32>
    %c0_17 = arith.constant 0 : index
    %c0_18 = arith.constant 0 : index
    %27 = vector.load %arg4[%c0_17, %c0_18] : memref<64x256xf32, #tpu.memory_space<vmem>>, vector<64x256xf32>
    %cst_19 = arith.constant dense<0.000000e+00> : vector<8x256xf32>
    %28 = tpu.matmul %26, %27, %cst_19 {dimension_numbers = #tpu.dot_dimension_numbers<[1], [0], [0], [1], [0, 0, 1, 1], [], []>} : vector<8x64xf32>, vector<64x256xf32>, vector<8x256xf32> -> vector<8x256xf32>
    %c0_20 = arith.constant 0 : index
    %c0_21 = arith.constant 0 : index
    %29 = vector.load %arg10[%c0_20, %c0_21] : memref<8x72xf32, #tpu.memory_space<vmem>>, vector<8x72xf32>
    %c0_22 = arith.constant 0 : index
    %c0_23 = arith.constant 0 : index
    %30 = vector.load %arg11[%c0_22, %c0_23] : memref<8x1xf32, #tpu.memory_space<vmem>>, vector<8x1xf32>
    %c17_i32 = arith.constant 17 : i32
    %31 = tpu.dynamic_rotate %28 by %c17_i32 dim 1 : vector<8x256xf32>, i32 -> vector<8x256xf32>
    %32 = vector.extract_strided_slice %0 {offsets = [0, 0], sizes = [1, 256], strides = [1, 1]} : vector<9x256xf32> to vector<1x256xf32>
    %33 = vector.broadcast %32 : vector<1x256xf32> to vector<8x256xf32>
    %34 = arith.mulf %31, %33 : vector<8x256xf32>
    %c16_i32 = arith.constant 16 : i32
    %35 = tpu.dynamic_rotate %28 by %c16_i32 dim 1 : vector<8x256xf32>, i32 -> vector<8x256xf32>
    %36 = vector.extract_strided_slice %0 {offsets = [1, 0], sizes = [1, 256], strides = [1, 1]} : vector<9x256xf32> to vector<1x256xf32>
    %37 = vector.broadcast %36 : vector<1x256xf32> to vector<8x256xf32>
    %38 = arith.mulf %35, %37 : vector<8x256xf32>
    %c15_i32 = arith.constant 15 : i32
    %39 = tpu.dynamic_rotate %28 by %c15_i32 dim 1 : vector<8x256xf32>, i32 -> vector<8x256xf32>
    %40 = vector.extract_strided_slice %0 {offsets = [2, 0], sizes = [1, 256], strides = [1, 1]} : vector<9x256xf32> to vector<1x256xf32>
    %41 = vector.broadcast %40 : vector<1x256xf32> to vector<8x256xf32>
    %42 = arith.mulf %39, %41 : vector<8x256xf32>
    %c1_i32 = arith.constant 1 : i32
    %43 = tpu.dynamic_rotate %28 by %c1_i32 dim 1 : vector<8x256xf32>, i32 -> vector<8x256xf32>
    %44 = vector.extract_strided_slice %0 {offsets = [3, 0], sizes = [1, 256], strides = [1, 1]} : vector<9x256xf32> to vector<1x256xf32>
    %45 = vector.broadcast %44 : vector<1x256xf32> to vector<8x256xf32>
    %46 = arith.mulf %43, %45 : vector<8x256xf32>
    %c255_i32 = arith.constant 255 : i32
    %47 = tpu.dynamic_rotate %28 by %c255_i32 dim 1 : vector<8x256xf32>, i32 -> vector<8x256xf32>
    %48 = vector.extract_strided_slice %0 {offsets = [5, 0], sizes = [1, 256], strides = [1, 1]} : vector<9x256xf32> to vector<1x256xf32>
    %49 = vector.broadcast %48 : vector<1x256xf32> to vector<8x256xf32>
    %50 = arith.mulf %47, %49 : vector<8x256xf32>
    %c241_i32 = arith.constant 241 : i32
    %51 = tpu.dynamic_rotate %28 by %c241_i32 dim 1 : vector<8x256xf32>, i32 -> vector<8x256xf32>
    %52 = vector.extract_strided_slice %0 {offsets = [6, 0], sizes = [1, 256], strides = [1, 1]} : vector<9x256xf32> to vector<1x256xf32>
    %53 = vector.broadcast %52 : vector<1x256xf32> to vector<8x256xf32>
    %54 = arith.mulf %51, %53 : vector<8x256xf32>
    %c240_i32 = arith.constant 240 : i32
    %55 = tpu.dynamic_rotate %28 by %c240_i32 dim 1 : vector<8x256xf32>, i32 -> vector<8x256xf32>
    %56 = vector.extract_strided_slice %0 {offsets = [7, 0], sizes = [1, 256], strides = [1, 1]} : vector<9x256xf32> to vector<1x256xf32>
    %57 = vector.broadcast %56 : vector<1x256xf32> to vector<8x256xf32>
    %58 = arith.mulf %55, %57 : vector<8x256xf32>
    %c239_i32 = arith.constant 239 : i32
    %59 = tpu.dynamic_rotate %28 by %c239_i32 dim 1 : vector<8x256xf32>, i32 -> vector<8x256xf32>
    %60 = vector.extract_strided_slice %0 {offsets = [8, 0], sizes = [1, 256], strides = [1, 1]} : vector<9x256xf32> to vector<1x256xf32>
    %61 = vector.broadcast %60 : vector<1x256xf32> to vector<8x256xf32>
    %62 = arith.mulf %59, %61 : vector<8x256xf32>
    %63 = tpu.concatenate %34, %38, %42, %46, %28, %50, %54, %58, %62 in 0 : vector<8x256xf32>, vector<8x256xf32>, vector<8x256xf32>, vector<8x256xf32>, vector<8x256xf32>, vector<8x256xf32>, vector<8x256xf32>, vector<8x256xf32>, vector<8x256xf32> -> vector<72x256xf32>
    %cst_24 = arith.constant dense<0.000000e+00> : vector<8x256xf32>
    %64 = tpu.matmul %29, %63, %cst_24 {dimension_numbers = #tpu.dot_dimension_numbers<[1], [0], [0], [1], [0, 0, 1, 1], [], []>} : vector<8x72xf32>, vector<72x256xf32>, vector<8x256xf32> -> vector<8x256xf32>
    %65 = vector.broadcast %30 : vector<8x1xf32> to vector<8x256xf32>
    %66 = arith.addf %64, %65 : vector<8x256xf32>
    %c0_25 = arith.constant 0 : index
    %c0_26 = arith.constant 0 : index
    %c0_27 = arith.constant 0 : index
    %67 = vector.load %arg3[%c0_25, %c0_26, %c0_27] : memref<1x8x256xf32, #tpu.memory_space<vmem>>, vector<1x8x256xf32>
    %68 = vector.shape_cast %67 : vector<1x8x256xf32> to vector<8x256xf32>
    %69 = tpu.concatenate %66, %68 in 0 : vector<8x256xf32>, vector<8x256xf32> -> vector<16x256xf32>
    %c0_28 = arith.constant 0 : index
    %c0_29 = arith.constant 0 : index
    %70 = vector.load %arg12[%c0_28, %c0_29] : memref<16x1xf32, #tpu.memory_space<vmem>>, vector<16x1xf32>
    %c0_30 = arith.constant 0 : index
    %c0_31 = arith.constant 0 : index
    %71 = vector.load %arg13[%c0_30, %c0_31] : memref<16x1xf32, #tpu.memory_space<vmem>>, vector<16x1xf32>
    %c0_32 = arith.constant 0 : index
    %c0_33 = arith.constant 0 : index
    %72 = vector.load %arg14[%c0_32, %c0_33] : memref<16x16xf32, #tpu.memory_space<vmem>>, vector<16x16xf32>
    %cst_34 = arith.constant dense<0.000000e+00> : vector<16xf32>
    %73 = vector.multi_reduction <add>, %69, %cst_34 [1] : vector<16x256xf32> to vector<16xf32>
    %74 = vector.shape_cast %73 : vector<16xf32> to vector<16x1xf32>
    %cst_35 = arith.constant 2.560000e+02 : f32
    %75 = vector.broadcast %cst_35 : f32 to vector<16x1xf32>
    %76 = arith.divf %74, %75 : vector<16x1xf32>
    %77 = arith.mulf %69, %69 : vector<16x256xf32>
    %cst_36 = arith.constant dense<0.000000e+00> : vector<16xf32>
    %78 = vector.multi_reduction <add>, %77, %cst_36 [1] : vector<16x256xf32> to vector<16xf32>
    %79 = vector.shape_cast %78 : vector<16xf32> to vector<16x1xf32>
    %cst_37 = arith.constant 2.560000e+02 : f32
    %80 = vector.broadcast %cst_37 : f32 to vector<16x1xf32>
    %81 = arith.divf %79, %80 : vector<16x1xf32>
    %cst_38 = arith.constant dense<0.000000e+00> : vector<16x1xf32>
    %82 = tpu.matmul %72, %76, %cst_38 {dimension_numbers = #tpu.dot_dimension_numbers<[1], [0], [0], [1], [0, 0, 1, 1], [], []>} : vector<16x16xf32>, vector<16x1xf32>, vector<16x1xf32> -> vector<16x1xf32>
    %cst_39 = arith.constant dense<0.000000e+00> : vector<16x1xf32>
    %83 = tpu.matmul %72, %81, %cst_39 {dimension_numbers = #tpu.dot_dimension_numbers<[1], [0], [0], [1], [0, 0, 1, 1], [], []>} : vector<16x16xf32>, vector<16x1xf32>, vector<16x1xf32> -> vector<16x1xf32>
    %84 = arith.mulf %82, %82 : vector<16x1xf32>
    %85 = arith.subf %83, %84 : vector<16x1xf32>
    %cst_40 = arith.constant 0.000000e+00 : f32
    %86 = vector.broadcast %cst_40 : f32 to vector<16x1xf32>
    %87 = arith.maximumf %85, %86 : vector<16x1xf32>
    %88 = vector.broadcast %82 : vector<16x1xf32> to vector<16x256xf32>
    %89 = arith.subf %69, %88 : vector<16x256xf32>
    %cst_41 = arith.constant 9.99999974E-6 : f32
    %90 = vector.broadcast %cst_41 : f32 to vector<16x1xf32>
    %91 = arith.addf %87, %90 : vector<16x1xf32>
    %92 = math.rsqrt %91 : vector<16x1xf32>
    %93 = arith.mulf %92, %70 : vector<16x1xf32>
    %94 = vector.broadcast %93 : vector<16x1xf32> to vector<16x256xf32>
    %95 = arith.mulf %89, %94 : vector<16x256xf32>
    %96 = vector.broadcast %71 : vector<16x1xf32> to vector<16x256xf32>
    %97 = arith.addf %95, %96 : vector<16x256xf32>
    %98 = arith.negf %97 : vector<16x256xf32>
    %99 = math.exp %98 : vector<16x256xf32>
    %cst_42 = arith.constant 1.000000e+00 : f32
    %100 = vector.broadcast %cst_42 : f32 to vector<16x256xf32>
    %101 = arith.addf %100, %99 : vector<16x256xf32>
    %102 = arith.divf %100, %101 : vector<16x256xf32>
    %103 = arith.mulf %97, %102 : vector<16x256xf32>
    %c0_43 = arith.constant 0 : index
    %c0_44 = arith.constant 0 : index
    %104 = vector.load %arg15[%c0_43, %c0_44] : memref<8x144xf32, #tpu.memory_space<vmem>>, vector<8x144xf32>
    %c0_45 = arith.constant 0 : index
    %c0_46 = arith.constant 0 : index
    %105 = vector.load %arg16[%c0_45, %c0_46] : memref<8x1xf32, #tpu.memory_space<vmem>>, vector<8x1xf32>
    %c17_i32_47 = arith.constant 17 : i32
    %106 = tpu.dynamic_rotate %103 by %c17_i32_47 dim 1 : vector<16x256xf32>, i32 -> vector<16x256xf32>
    %107 = vector.extract_strided_slice %0 {offsets = [0, 0], sizes = [1, 256], strides = [1, 1]} : vector<9x256xf32> to vector<1x256xf32>
    %108 = vector.broadcast %107 : vector<1x256xf32> to vector<16x256xf32>
    %109 = arith.mulf %106, %108 : vector<16x256xf32>
    %c16_i32_48 = arith.constant 16 : i32
    %110 = tpu.dynamic_rotate %103 by %c16_i32_48 dim 1 : vector<16x256xf32>, i32 -> vector<16x256xf32>
    %111 = vector.extract_strided_slice %0 {offsets = [1, 0], sizes = [1, 256], strides = [1, 1]} : vector<9x256xf32> to vector<1x256xf32>
    %112 = vector.broadcast %111 : vector<1x256xf32> to vector<16x256xf32>
    %113 = arith.mulf %110, %112 : vector<16x256xf32>
    %c15_i32_49 = arith.constant 15 : i32
    %114 = tpu.dynamic_rotate %103 by %c15_i32_49 dim 1 : vector<16x256xf32>, i32 -> vector<16x256xf32>
    %115 = vector.extract_strided_slice %0 {offsets = [2, 0], sizes = [1, 256], strides = [1, 1]} : vector<9x256xf32> to vector<1x256xf32>
    %116 = vector.broadcast %115 : vector<1x256xf32> to vector<16x256xf32>
    %117 = arith.mulf %114, %116 : vector<16x256xf32>
    %c1_i32_50 = arith.constant 1 : i32
    %118 = tpu.dynamic_rotate %103 by %c1_i32_50 dim 1 : vector<16x256xf32>, i32 -> vector<16x256xf32>
    %119 = vector.extract_strided_slice %0 {offsets = [3, 0], sizes = [1, 256], strides = [1, 1]} : vector<9x256xf32> to vector<1x256xf32>
    %120 = vector.broadcast %119 : vector<1x256xf32> to vector<16x256xf32>
    %121 = arith.mulf %118, %120 : vector<16x256xf32>
    %c255_i32_51 = arith.constant 255 : i32
    %122 = tpu.dynamic_rotate %103 by %c255_i32_51 dim 1 : vector<16x256xf32>, i32 -> vector<16x256xf32>
    %123 = vector.extract_strided_slice %0 {offsets = [5, 0], sizes = [1, 256], strides = [1, 1]} : vector<9x256xf32> to vector<1x256xf32>
    %124 = vector.broadcast %123 : vector<1x256xf32> to vector<16x256xf32>
    %125 = arith.mulf %122, %124 : vector<16x256xf32>
    %c241_i32_52 = arith.constant 241 : i32
    %126 = tpu.dynamic_rotate %103 by %c241_i32_52 dim 1 : vector<16x256xf32>, i32 -> vector<16x256xf32>
    %127 = vector.extract_strided_slice %0 {offsets = [6, 0], sizes = [1, 256], strides = [1, 1]} : vector<9x256xf32> to vector<1x256xf32>
    %128 = vector.broadcast %127 : vector<1x256xf32> to vector<16x256xf32>
    %129 = arith.mulf %126, %128 : vector<16x256xf32>
    %c240_i32_53 = arith.constant 240 : i32
    %130 = tpu.dynamic_rotate %103 by %c240_i32_53 dim 1 : vector<16x256xf32>, i32 -> vector<16x256xf32>
    %131 = vector.extract_strided_slice %0 {offsets = [7, 0], sizes = [1, 256], strides = [1, 1]} : vector<9x256xf32> to vector<1x256xf32>
    %132 = vector.broadcast %131 : vector<1x256xf32> to vector<16x256xf32>
    %133 = arith.mulf %130, %132 : vector<16x256xf32>
    %c239_i32_54 = arith.constant 239 : i32
    %134 = tpu.dynamic_rotate %103 by %c239_i32_54 dim 1 : vector<16x256xf32>, i32 -> vector<16x256xf32>
    %135 = vector.extract_strided_slice %0 {offsets = [8, 0], sizes = [1, 256], strides = [1, 1]} : vector<9x256xf32> to vector<1x256xf32>
    %136 = vector.broadcast %135 : vector<1x256xf32> to vector<16x256xf32>
    %137 = arith.mulf %134, %136 : vector<16x256xf32>
    %138 = tpu.concatenate %109, %113, %117, %121, %103, %125, %129, %133, %137 in 0 : vector<16x256xf32>, vector<16x256xf32>, vector<16x256xf32>, vector<16x256xf32>, vector<16x256xf32>, vector<16x256xf32>, vector<16x256xf32>, vector<16x256xf32>, vector<16x256xf32> -> vector<144x256xf32>
    %cst_55 = arith.constant dense<0.000000e+00> : vector<8x256xf32>
    %139 = tpu.matmul %104, %138, %cst_55 {dimension_numbers = #tpu.dot_dimension_numbers<[1], [0], [0], [1], [0, 0, 1, 1], [], []>} : vector<8x144xf32>, vector<144x256xf32>, vector<8x256xf32> -> vector<8x256xf32>
    %140 = vector.broadcast %105 : vector<8x1xf32> to vector<8x256xf32>
    %141 = arith.addf %139, %140 : vector<8x256xf32>
    %c0_56 = arith.constant 0 : index
    %c0_57 = arith.constant 0 : index
    %142 = vector.load %arg17[%c0_56, %c0_57] : memref<8x1xf32, #tpu.memory_space<vmem>>, vector<8x1xf32>
    %c0_58 = arith.constant 0 : index
    %c0_59 = arith.constant 0 : index
    %143 = vector.load %arg18[%c0_58, %c0_59] : memref<8x1xf32, #tpu.memory_space<vmem>>, vector<8x1xf32>
    %c0_60 = arith.constant 0 : index
    %c0_61 = arith.constant 0 : index
    %144 = vector.load %arg19[%c0_60, %c0_61] : memref<8x8xf32, #tpu.memory_space<vmem>>, vector<8x8xf32>
    %cst_62 = arith.constant dense<0.000000e+00> : vector<8xf32>
    %145 = vector.multi_reduction <add>, %141, %cst_62 [1] : vector<8x256xf32> to vector<8xf32>
    %146 = vector.shape_cast %145 : vector<8xf32> to vector<8x1xf32>
    %cst_63 = arith.constant 2.560000e+02 : f32
    %147 = vector.broadcast %cst_63 : f32 to vector<8x1xf32>
    %148 = arith.divf %146, %147 : vector<8x1xf32>
    %149 = arith.mulf %141, %141 : vector<8x256xf32>
    %cst_64 = arith.constant dense<0.000000e+00> : vector<8xf32>
    %150 = vector.multi_reduction <add>, %149, %cst_64 [1] : vector<8x256xf32> to vector<8xf32>
    %151 = vector.shape_cast %150 : vector<8xf32> to vector<8x1xf32>
    %cst_65 = arith.constant 2.560000e+02 : f32
    %152 = vector.broadcast %cst_65 : f32 to vector<8x1xf32>
    %153 = arith.divf %151, %152 : vector<8x1xf32>
    %cst_66 = arith.constant dense<0.000000e+00> : vector<8x1xf32>
    %154 = tpu.matmul %144, %148, %cst_66 {dimension_numbers = #tpu.dot_dimension_numbers<[1], [0], [0], [1], [0, 0, 1, 1], [], []>} : vector<8x8xf32>, vector<8x1xf32>, vector<8x1xf32> -> vector<8x1xf32>
    %cst_67 = arith.constant dense<0.000000e+00> : vector<8x1xf32>
    %155 = tpu.matmul %144, %153, %cst_67 {dimension_numbers = #tpu.dot_dimension_numbers<[1], [0], [0], [1], [0, 0, 1, 1], [], []>} : vector<8x8xf32>, vector<8x1xf32>, vector<8x1xf32> -> vector<8x1xf32>
    %156 = arith.mulf %154, %154 : vector<8x1xf32>
    %157 = arith.subf %155, %156 : vector<8x1xf32>
    %cst_68 = arith.constant 0.000000e+00 : f32
    %158 = vector.broadcast %cst_68 : f32 to vector<8x1xf32>
    %159 = arith.maximumf %157, %158 : vector<8x1xf32>
    %160 = vector.broadcast %154 : vector<8x1xf32> to vector<8x256xf32>
    %161 = arith.subf %141, %160 : vector<8x256xf32>
    %cst_69 = arith.constant 9.99999974E-6 : f32
    %162 = vector.broadcast %cst_69 : f32 to vector<8x1xf32>
    %163 = arith.addf %159, %162 : vector<8x1xf32>
    %164 = math.rsqrt %163 : vector<8x1xf32>
    %165 = arith.mulf %164, %142 : vector<8x1xf32>
    %166 = vector.broadcast %165 : vector<8x1xf32> to vector<8x256xf32>
    %167 = arith.mulf %161, %166 : vector<8x256xf32>
    %168 = vector.broadcast %143 : vector<8x1xf32> to vector<8x256xf32>
    %169 = arith.addf %167, %168 : vector<8x256xf32>
    %170 = arith.negf %169 : vector<8x256xf32>
    %171 = math.exp %170 : vector<8x256xf32>
    %cst_70 = arith.constant 1.000000e+00 : f32
    %172 = vector.broadcast %cst_70 : f32 to vector<8x256xf32>
    %173 = arith.addf %172, %171 : vector<8x256xf32>
    %174 = arith.divf %172, %173 : vector<8x256xf32>
    %175 = arith.mulf %169, %174 : vector<8x256xf32>
    %c0_71 = arith.constant 0 : index
    %c0_72 = arith.constant 0 : index
    %176 = vector.load %arg20[%c0_71, %c0_72] : memref<8x72xf32, #tpu.memory_space<vmem>>, vector<8x72xf32>
    %c0_73 = arith.constant 0 : index
    %c0_74 = arith.constant 0 : index
    %177 = vector.load %arg21[%c0_73, %c0_74] : memref<8x1xf32, #tpu.memory_space<vmem>>, vector<8x1xf32>
    %c17_i32_75 = arith.constant 17 : i32
    %178 = tpu.dynamic_rotate %175 by %c17_i32_75 dim 1 : vector<8x256xf32>, i32 -> vector<8x256xf32>
    %179 = vector.extract_strided_slice %0 {offsets = [0, 0], sizes = [1, 256], strides = [1, 1]} : vector<9x256xf32> to vector<1x256xf32>
    %180 = vector.broadcast %179 : vector<1x256xf32> to vector<8x256xf32>
    %181 = arith.mulf %178, %180 : vector<8x256xf32>
    %c16_i32_76 = arith.constant 16 : i32
    %182 = tpu.dynamic_rotate %175 by %c16_i32_76 dim 1 : vector<8x256xf32>, i32 -> vector<8x256xf32>
    %183 = vector.extract_strided_slice %0 {offsets = [1, 0], sizes = [1, 256], strides = [1, 1]} : vector<9x256xf32> to vector<1x256xf32>
    %184 = vector.broadcast %183 : vector<1x256xf32> to vector<8x256xf32>
    %185 = arith.mulf %182, %184 : vector<8x256xf32>
    %c15_i32_77 = arith.constant 15 : i32
    %186 = tpu.dynamic_rotate %175 by %c15_i32_77 dim 1 : vector<8x256xf32>, i32 -> vector<8x256xf32>
    %187 = vector.extract_strided_slice %0 {offsets = [2, 0], sizes = [1, 256], strides = [1, 1]} : vector<9x256xf32> to vector<1x256xf32>
    %188 = vector.broadcast %187 : vector<1x256xf32> to vector<8x256xf32>
    %189 = arith.mulf %186, %188 : vector<8x256xf32>
    %c1_i32_78 = arith.constant 1 : i32
    %190 = tpu.dynamic_rotate %175 by %c1_i32_78 dim 1 : vector<8x256xf32>, i32 -> vector<8x256xf32>
    %191 = vector.extract_strided_slice %0 {offsets = [3, 0], sizes = [1, 256], strides = [1, 1]} : vector<9x256xf32> to vector<1x256xf32>
    %192 = vector.broadcast %191 : vector<1x256xf32> to vector<8x256xf32>
    %193 = arith.mulf %190, %192 : vector<8x256xf32>
    %c255_i32_79 = arith.constant 255 : i32
    %194 = tpu.dynamic_rotate %175 by %c255_i32_79 dim 1 : vector<8x256xf32>, i32 -> vector<8x256xf32>
    %195 = vector.extract_strided_slice %0 {offsets = [5, 0], sizes = [1, 256], strides = [1, 1]} : vector<9x256xf32> to vector<1x256xf32>
    %196 = vector.broadcast %195 : vector<1x256xf32> to vector<8x256xf32>
    %197 = arith.mulf %194, %196 : vector<8x256xf32>
    %c241_i32_80 = arith.constant 241 : i32
    %198 = tpu.dynamic_rotate %175 by %c241_i32_80 dim 1 : vector<8x256xf32>, i32 -> vector<8x256xf32>
    %199 = vector.extract_strided_slice %0 {offsets = [6, 0], sizes = [1, 256], strides = [1, 1]} : vector<9x256xf32> to vector<1x256xf32>
    %200 = vector.broadcast %199 : vector<1x256xf32> to vector<8x256xf32>
    %201 = arith.mulf %198, %200 : vector<8x256xf32>
    %c240_i32_81 = arith.constant 240 : i32
    %202 = tpu.dynamic_rotate %175 by %c240_i32_81 dim 1 : vector<8x256xf32>, i32 -> vector<8x256xf32>
    %203 = vector.extract_strided_slice %0 {offsets = [7, 0], sizes = [1, 256], strides = [1, 1]} : vector<9x256xf32> to vector<1x256xf32>
    %204 = vector.broadcast %203 : vector<1x256xf32> to vector<8x256xf32>
    %205 = arith.mulf %202, %204 : vector<8x256xf32>
    %c239_i32_82 = arith.constant 239 : i32
    %206 = tpu.dynamic_rotate %175 by %c239_i32_82 dim 1 : vector<8x256xf32>, i32 -> vector<8x256xf32>
    %207 = vector.extract_strided_slice %0 {offsets = [8, 0], sizes = [1, 256], strides = [1, 1]} : vector<9x256xf32> to vector<1x256xf32>
    %208 = vector.broadcast %207 : vector<1x256xf32> to vector<8x256xf32>
    %209 = arith.mulf %206, %208 : vector<8x256xf32>
    %210 = tpu.concatenate %181, %185, %189, %193, %175, %197, %201, %205, %209 in 0 : vector<8x256xf32>, vector<8x256xf32>, vector<8x256xf32>, vector<8x256xf32>, vector<8x256xf32>, vector<8x256xf32>, vector<8x256xf32>, vector<8x256xf32>, vector<8x256xf32> -> vector<72x256xf32>
    %cst_83 = arith.constant dense<0.000000e+00> : vector<8x256xf32>
    %211 = tpu.matmul %176, %210, %cst_83 {dimension_numbers = #tpu.dot_dimension_numbers<[1], [0], [0], [1], [0, 0, 1, 1], [], []>} : vector<8x72xf32>, vector<72x256xf32>, vector<8x256xf32> -> vector<8x256xf32>
    %212 = vector.broadcast %177 : vector<8x1xf32> to vector<8x256xf32>
    %213 = arith.addf %211, %212 : vector<8x256xf32>
    %214 = arith.addf %213, %141 : vector<8x256xf32>
    %c0_84 = arith.constant 0 : index
    %c0_85 = arith.constant 0 : index
    %c0_86 = arith.constant 0 : index
    %215 = vector.load %arg22[%c0_84, %c0_85, %c0_86] : memref<1x8x256xf32, #tpu.memory_space<vmem>>, vector<1x8x256xf32>
    %216 = vector.shape_cast %215 : vector<1x8x256xf32> to vector<8x256xf32>
    %217 = vector.shape_cast %214 : vector<8x256xf32> to vector<1x8x256xf32>
    tpu.vector_store %arg22[%c0_84, %c0_85, %c0_86], %217 {strides = array<i32>} : memref<1x8x256xf32, #tpu.memory_space<vmem>>, vector<1x8x256xf32>,
    return
  }
  func.func @transform_0(%arg0: i32) -> (i32, i32, i32) {
    %c0_i32 = arith.constant 0 : i32
    %c0_i32_0 = arith.constant 0 : i32
    %c0_i32_1 = arith.constant 0 : i32
    return %arg0, %c0_i32, %c0_i32_0 : i32, i32, i32
  }
  func.func @transform_1(%arg0: i32) -> (i32, i32, i32) {
    %c0_i32 = arith.constant 0 : i32
    %c0_i32_0 = arith.constant 0 : i32
    %c0_i32_1 = arith.constant 0 : i32
    return %arg0, %c0_i32, %c0_i32_0 : i32, i32, i32
  }
  func.func @transform_2(%arg0: i32) -> (i32, i32, i32) {
    %c0_i32 = arith.constant 0 : i32
    %c0_i32_0 = arith.constant 0 : i32
    %c0_i32_1 = arith.constant 0 : i32
    return %arg0, %c0_i32, %c0_i32_0 : i32, i32, i32
  }
  func.func @transform_3(%arg0: i32) -> (i32, i32) {
    %c0_i32 = arith.constant 0 : i32
    %c0_i32_0 = arith.constant 0 : i32
    %c0_i32_1 = arith.constant 0 : i32
    return %c0_i32, %c0_i32_0 : i32, i32
  }
  func.func @transform_4(%arg0: i32) -> (i32, i32) {
    %c0_i32 = arith.constant 0 : i32
    %c0_i32_0 = arith.constant 0 : i32
    %c0_i32_1 = arith.constant 0 : i32
    return %c0_i32, %c0_i32_0 : i32, i32
  }
  func.func @transform_5(%arg0: i32) -> (i32, i32) {
    %c0_i32 = arith.constant 0 : i32
    %c0_i32_0 = arith.constant 0 : i32
    %c0_i32_1 = arith.constant 0 : i32
    return %c0_i32, %c0_i32_0 : i32, i32
  }
  func.func @transform_6(%arg0: i32) -> (i32, i32) {
    %c0_i32 = arith.constant 0 : i32
    %c0_i32_0 = arith.constant 0 : i32
    %c0_i32_1 = arith.constant 0 : i32
    return %c0_i32, %c0_i32_0 : i32, i32
  }
  func.func @transform_7(%arg0: i32) -> (i32, i32) {
    %c0_i32 = arith.constant 0 : i32
    %c0_i32_0 = arith.constant 0 : i32
    %c0_i32_1 = arith.constant 0 : i32
    return %c0_i32, %c0_i32_0 : i32, i32
  }
  func.func @transform_8(%arg0: i32) -> (i32, i32) {
    %c0_i32 = arith.constant 0 : i32
    %c0_i32_0 = arith.constant 0 : i32
    %c0_i32_1 = arith.constant 0 : i32
    return %c0_i32, %c0_i32_0 : i32, i32
  }
  func.func @transform_9(%arg0: i32) -> (i32, i32) {
    %c0_i32 = arith.constant 0 : i32
    %c0_i32_0 = arith.constant 0 : i32
    %c0_i32_1 = arith.constant 0 : i32
    return %c0_i32, %c0_i32_0 : i32, i32
  }
  func.func @transform_10(%arg0: i32) -> (i32, i32) {
    %c0_i32 = arith.constant 0 : i32
    %c0_i32_0 = arith.constant 0 : i32
    %c0_i32_1 = arith.constant 0 : i32
    return %c0_i32, %c0_i32_0 : i32, i32
  }
  func.func @transform_11(%arg0: i32) -> (i32, i32) {
    %c0_i32 = arith.constant 0 : i32
    %c0_i32_0 = arith.constant 0 : i32
    %c0_i32_1 = arith.constant 0 : i32
    return %c0_i32, %c0_i32_0 : i32, i32
  }
  func.func @transform_12(%arg0: i32) -> (i32, i32) {
    %c0_i32 = arith.constant 0 : i32
    %c0_i32_0 = arith.constant 0 : i32
    %c0_i32_1 = arith.constant 0 : i32
    return %c0_i32, %c0_i32_0 : i32, i32
  }
  func.func @transform_13(%arg0: i32) -> (i32, i32) {
    %c0_i32 = arith.constant 0 : i32
    %c0_i32_0 = arith.constant 0 : i32
    %c0_i32_1 = arith.constant 0 : i32
    return %c0_i32, %c0_i32_0 : i32, i32
  }
  func.func @transform_14(%arg0: i32) -> (i32, i32) {
    %c0_i32 = arith.constant 0 : i32
    %c0_i32_0 = arith.constant 0 : i32
    %c0_i32_1 = arith.constant 0 : i32
    return %c0_i32, %c0_i32_0 : i32, i32
  }
  func.func @transform_15(%arg0: i32) -> (i32, i32) {
    %c0_i32 = arith.constant 0 : i32
    %c0_i32_0 = arith.constant 0 : i32
    %c0_i32_1 = arith.constant 0 : i32
    return %c0_i32, %c0_i32_0 : i32, i32
  }
  func.func @transform_16(%arg0: i32) -> (i32, i32) {
    %c0_i32 = arith.constant 0 : i32
    %c0_i32_0 = arith.constant 0 : i32
    %c0_i32_1 = arith.constant 0 : i32
    return %c0_i32, %c0_i32_0 : i32, i32
  }
  func.func @transform_17(%arg0: i32) -> (i32, i32) {
    %c0_i32 = arith.constant 0 : i32
    %c0_i32_0 = arith.constant 0 : i32
    %c0_i32_1 = arith.constant 0 : i32
    return %c0_i32, %c0_i32_0 : i32, i32
  }
  func.func @transform_18(%arg0: i32) -> (i32, i32) {
    %c0_i32 = arith.constant 0 : i32
    %c0_i32_0 = arith.constant 0 : i32
    %c0_i32_1 = arith.constant 0 : i32
    return %c0_i32, %c0_i32_0 : i32, i32
  }
  func.func @transform_19(%arg0: i32) -> (i32, i32) {
    %c0_i32 = arith.constant 0 : i32
    %c0_i32_0 = arith.constant 0 : i32
    %c0_i32_1 = arith.constant 0 : i32
    return %c0_i32, %c0_i32_0 : i32, i32
  }
  func.func @transform_20(%arg0: i32) -> (i32, i32) {
    %c0_i32 = arith.constant 0 : i32
    %c0_i32_0 = arith.constant 0 : i32
    %c0_i32_1 = arith.constant 0 : i32
    return %c0_i32, %c0_i32_0 : i32, i32
  }
  func.func @transform_21(%arg0: i32) -> (i32, i32, i32) {
    %c0_i32 = arith.constant 0 : i32
    %c0_i32_0 = arith.constant 0 : i32
    %c0_i32_1 = arith.constant 0 : i32
    return %arg0, %c0_i32, %c0_i32_0 : i32, i32, i32
  }
}

</mosaic_0001>

<llo_original>
// kernel: up_block2_forward.1
$region0: #{up_block2_forward.1}
  #allocation0 [shape = 'u32[]', space=smem, size = 0x4, offset = 0x4, fixed_abs, tag = 'smem constant byte address 0x4 - core index']
  #allocation1 [shape = 'u32[144,128]{1,0:T(1,128)}', space=vmem, size = 0x12000, scoped, tag = 'internal scratch']
  %s0 = inlined_call_operand.vmem [shape: f32[2,8,1], index: 0, kind: input, shape index: {}]
  %s1 = inlined_call_operand.vmem [shape: f32[2,8,64], index: 1, kind: input, shape index: {}]
  %s2 = inlined_call_operand.vmem [shape: f32[2,8,256], index: 2, kind: input, shape index: {}]
  %s3 = inlined_call_operand.vmem [shape: f32[64,256], index: 3, kind: input, shape index: {}]
  %s4 = inlined_call_operand.vmem [shape: f32[9,256], index: 4, kind: input, shape index: {}]
  %s5 = inlined_call_operand.vmem [shape: f32[8,8], index: 5, kind: input, shape index: {}]
  %s6 = inlined_call_operand.vmem [shape: f32[1,8], index: 6, kind: input, shape index: {}]
  %s7 = inlined_call_operand.vmem [shape: f32[8,8], index: 7, kind: input, shape index: {}]
  %s8 = inlined_call_operand.vmem [shape: f32[8,1], index: 8, kind: input, shape index: {}]
  %s9 = inlined_call_operand.vmem [shape: f32[8,72], index: 9, kind: input, shape index: {}]
  %s10 = inlined_call_operand.vmem [shape: f32[8,1], index: 10, kind: input, shape index: {}]
  %s11 = inlined_call_operand.vmem [shape: f32[16,1], index: 11, kind: input, shape index: {}]
  %s12 = inlined_call_operand.vmem [shape: f32[16,1], index: 12, kind: input, shape index: {}]
  %s13 = inlined_call_operand.vmem [shape: f32[16,16], index: 13, kind: input, shape index: {}]
  %s14 = inlined_call_operand.vmem [shape: f32[8,144], index: 14, kind: input, shape index: {}]
  %s15 = inlined_call_operand.vmem [shape: f32[8,1], index: 15, kind: input, shape index: {}]
  %s16 = inlined_call_operand.vmem [shape: f32[8,1], index: 16, kind: input, shape index: {}]
  %s17 = inlined_call_operand.vmem [shape: f32[8,1], index: 17, kind: input, shape index: {}]
  %s18 = inlined_call_operand.vmem [shape: f32[8,8], index: 18, kind: input, shape index: {}]
  %s19 = inlined_call_operand.vmem [shape: f32[8,72], index: 19, kind: input, shape index: {}]
  %s20 = inlined_call_operand.vmem [shape: f32[8,1], index: 20, kind: input, shape index: {}]
  %s21 = inlined_call_operand.vmem [shape: f32[2,8,256], index: 21, kind: output, shape index: {}]
  %s22 = sld [smem:[#allocation0]]
  $region117: #{up_block2_forward.1} parent=0
    _
  %s24 = ssub.s32 1, %s22
  %s25 = scalar_select 0, %s24, %s22
  loop: start=0, step=1, limit=4
  $region2: #{up_block2_forward.1} parent=0 // loop_pre_header
    _
  $region3: #{up_block2_forward.1} parent=0 // loop_header
    %s27 = sphi 0, %s31
    %p28 = scmp.ge.s32.totalorder %s27, 4
    %s37 = sphi 0, %s39
    %s40 = sphi 0, %s37
    %s41 = sphi 0, %s40
    %s57 = sphi 0, %s41
    %s63 = sphi 0, %s65
    %s66 = sphi 0, %s63
    %s67 = sphi 0, %s66
    %s83 = sphi 0, %s67
    %s89 = sphi 0, %s91
    %s92 = sphi 0, %s89
    %s93 = sphi 0, %s92
    %s109 = sphi 0, %s93
    %s113 = sphi 0, %s113
    %s115 = sphi 0, %s113
    %s116 = sphi 0, %s115
    %s130 = sphi 0, %s116
    %s134 = sphi 0, %s134
    %s136 = sphi 0, %s134
    %s137 = sphi 0, %s136
    %s151 = sphi 0, %s137
    %s155 = sphi 0, %s155
    %s157 = sphi 0, %s155
    %s158 = sphi 0, %s157
    %s172 = sphi 0, %s158
    %s176 = sphi 0, %s176
    %s178 = sphi 0, %s176
    %s179 = sphi 0, %s178
    %s193 = sphi 0, %s179
    %s197 = sphi 0, %s197
    %s199 = sphi 0, %s197
    %s200 = sphi 0, %s199
    %s214 = sphi 0, %s200
    %s218 = sphi 0, %s218
    %s220 = sphi 0, %s218
    %s221 = sphi 0, %s220
    %s235 = sphi 0, %s221
    %s239 = sphi 0, %s239
    %s241 = sphi 0, %s239
    %s242 = sphi 0, %s241
    %s256 = sphi 0, %s242
    %s260 = sphi 0, %s260
    %s262 = sphi 0, %s260
    %s263 = sphi 0, %s262
    %s277 = sphi 0, %s263
    %s281 = sphi 0, %s281
    %s283 = sphi 0, %s281
    %s284 = sphi 0, %s283
    %s298 = sphi 0, %s284
    %s302 = sphi 0, %s302
    %s304 = sphi 0, %s302
    %s305 = sphi 0, %s304
    %s319 = sphi 0, %s305
    %s323 = sphi 0, %s323
    %s325 = sphi 0, %s323
    %s326 = sphi 0, %s325
    %s340 = sphi 0, %s326
    %s344 = sphi 0, %s344
    %s346 = sphi 0, %s344
    %s347 = sphi 0, %s346
    %s361 = sphi 0, %s347
    %s365 = sphi 0, %s365
    %s367 = sphi 0, %s365
    %s368 = sphi 0, %s367
    %s382 = sphi 0, %s368
    %s386 = sphi 0, %s386
    %s388 = sphi 0, %s386
    %s389 = sphi 0, %s388
    %s403 = sphi 0, %s389
    %s407 = sphi 0, %s407
    %s409 = sphi 0, %s407
    %s410 = sphi 0, %s409
    %s424 = sphi 0, %s410
    %s428 = sphi 0, %s428
    %s430 = sphi 0, %s428
    %s431 = sphi 0, %s430
    %s445 = sphi 0, %s431
    %s449 = sphi 0, %s449
    %s451 = sphi 0, %s449
    %s452 = sphi 0, %s451
    %s466 = sphi 0, %s452
    %s470 = sphi 0, %s470
    %s472 = sphi 0, %s470
    %s473 = sphi 0, %s472
    %s487 = sphi 0, %s473
    %s493 = sphi 0, %s495
    %s496 = sphi 0, %s493
    %s497 = sphi 0, %s496
    %s513 = sphi 0, %s497
  $region4: #{up_block2_forward.1} parent=0 // loop_header_branch
    %30 = sbr.rel (%p28) target = $region8
  $region5: #{up_block2_forward.1} parent=0 // loop_body
    %s32 = ssub.s32 %s27, 1
    %s33 = ssub.s32 %s27, 2
    %s34 = sadd.s32 %s27, 1
    %s35 = ssub.s32 %s27, %s34
    %p36 = scmp.eq.s32.totalorder %s35, 0
    %s38 = sadd.s32 %s37, 1
    %s39 = scalar_select %p36, %s37, %s38
    %p42 = pneg %p36
    %p43 = scmp.eq.s32.totalorder %s27, 1
    %p44 = por %p42, %p43
    %p45 = scmp.ne.s32.totalorder %s37, %s40
    %p46 = scmp.eq.s32.totalorder %s27, 0
    %p47 = por %p45, %p46
    %p48 = scmp.ne.s32.totalorder %s37, %s40
    %p49 = scmp.eq.s32.totalorder %s32, 1
    %p50 = por %p48, %p49
    %p51 = scmp.ne.s32.totalorder %s40, %s41
    %p52 = scmp.eq.s32.totalorder %s32, 0
    %p53 = por %p51, %p52
    %p54 = scmp.ne.s32.totalorder %s40, %s41
    %p55 = scmp.eq.s32.totalorder %s33, 1
    %p56 = por %p54, %p55
    %p58 = scmp.ne.s32.totalorder %s41, %s57
    %p59 = scmp.eq.s32.totalorder %s33, 0
    %p60 = por %p58, %p59
    %s61 = ssub.s32 %s27, %s34
    %p62 = scmp.eq.s32.totalorder %s61, 0
    %s64 = sadd.s32 %s63, 1
    %s65 = scalar_select %p62, %s63, %s64
    %p68 = pneg %p62
    %p69 = scmp.eq.s32.totalorder %s27, 1
    %p70 = por %p68, %p69
    %p71 = scmp.ne.s32.totalorder %s63, %s66
    %p72 = scmp.eq.s32.totalorder %s27, 0
    %p73 = por %p71, %p72
    %p74 = scmp.ne.s32.totalorder %s63, %s66
    %p75 = scmp.eq.s32.totalorder %s32, 1
    %p76 = por %p74, %p75
    %p77 = scmp.ne.s32.totalorder %s66, %s67
    %p78 = scmp.eq.s32.totalorder %s32, 0
    %p79 = por %p77, %p78
    %p80 = scmp.ne.s32.totalorder %s66, %s67
    %p81 = scmp.eq.s32.totalorder %s33, 1
    %p82 = por %p80, %p81
    %p84 = scmp.ne.s32.totalorder %s67, %s83
    %p85 = scmp.eq.s32.totalorder %s33, 0
    %p86 = por %p84, %p85
    %s87 = ssub.s32 %s27, %s34
    %p88 = scmp.eq.s32.totalorder %s87, 0
    %s90 = sadd.s32 %s89, 1
    %s91 = scalar_select %p88, %s89, %s90
    %p94 = pneg %p88
    %p95 = scmp.eq.s32.totalorder %s27, 1
    %p96 = por %p94, %p95
    %p97 = scmp.ne.s32.totalorder %s89, %s92
    %p98 = scmp.eq.s32.totalorder %s27, 0
    %p99 = por %p97, %p98
    %p100 = scmp.ne.s32.totalorder %s89, %s92
    %p101 = scmp.eq.s32.totalorder %s32, 1
    %p102 = por %p100, %p101
    %p103 = scmp.ne.s32.totalorder %s92, %s93
    %p104 = scmp.eq.s32.totalorder %s32, 0
    %p105 = por %p103, %p104
    %p106 = scmp.ne.s32.totalorder %s92, %s93
    %p107 = scmp.eq.s32.totalorder %s33, 1
    %p108 = por %p106, %p107
    %p110 = scmp.ne.s32.totalorder %s93, %s109
    %p111 = scmp.eq.s32.totalorder %s33, 0
    %p112 = por %p110, %p111
    %s114 = sadd.s32 %s113, 1
    %p117 = scmp.eq.s32.totalorder %s27, 1
    %p118 = scmp.ne.s32.totalorder %s113, %s115
    %p119 = scmp.eq.s32.totalorder %s27, 0
    %p120 = por %p118, %p119
    %p121 = scmp.ne.s32.totalorder %s113, %s115
    %p122 = scmp.eq.s32.totalorder %s32, 1
    %p123 = por %p121, %p122
    %p124 = scmp.ne.s32.totalorder %s115, %s116
    %p125 = scmp.eq.s32.totalorder %s32, 0
    %p126 = por %p124, %p125
    %p127 = scmp.ne.s32.totalorder %s115, %s116
    %p128 = scmp.eq.s32.totalorder %s33, 1
    %p129 = por %p127, %p128
    %p131 = scmp.ne.s32.totalorder %s116, %s130
    %p132 = scmp.eq.s32.totalorder %s33, 0
    %p133 = por %p131, %p132
    %s135 = sadd.s32 %s134, 1
    %p138 = scmp.eq.s32.totalorder %s27, 1
    %p139 = scmp.ne.s32.totalorder %s134, %s136
    %p140 = scmp.eq.s32.totalorder %s27, 0
    %p141 = por %p139, %p140
    %p142 = scmp.ne.s32.totalorder %s134, %s136
    %p143 = scmp.eq.s32.totalorder %s32, 1
    %p144 = por %p142, %p143
    %p145 = scmp.ne.s32.totalorder %s136, %s137
    %p146 = scmp.eq.s32.totalorder %s32, 0
    %p147 = por %p145, %p146
    %p148 = scmp.ne.s32.totalorder %s136, %s137
    %p149 = scmp.eq.s32.totalorder %s33, 1
    %p150 = por %p148, %p149
    %p152 = scmp.ne.s32.totalorder %s137, %s151
    %p153 = scmp.eq.s32.totalorder %s33, 0
    %p154 = por %p152, %p153
    %s156 = sadd.s32 %s155, 1
    %p159 = scmp.eq.s32.totalorder %s27, 1
    %p160 = scmp.ne.s32.totalorder %s155, %s157
    %p161 = scmp.eq.s32.totalorder %s27, 0
    %p162 = por %p160, %p161
    %p163 = scmp.ne.s32.totalorder %s155, %s157
    %p164 = scmp.eq.s32.totalorder %s32, 1
    %p165 = por %p163, %p164
    %p166 = scmp.ne.s32.totalorder %s157, %s158
    %p167 = scmp.eq.s32.totalorder %s32, 0
    %p168 = por %p166, %p167
    %p169 = scmp.ne.s32.totalorder %s157, %s158
    %p170 = scmp.eq.s32.totalorder %s33, 1
    %p171 = por %p169, %p170
    %p173 = scmp.ne.s32.totalorder %s158, %s172
    %p174 = scmp.eq.s32.totalorder %s33, 0
    %p175 = por %p173, %p174
    %s177 = sadd.s32 %s176, 1
    %p180 = scmp.eq.s32.totalorder %s27, 1
    %p181 = scmp.ne.s32.totalorder %s176, %s178
    %p182 = scmp.eq.s32.totalorder %s27, 0
    %p183 = por %p181, %p182
    %p184 = scmp.ne.s32.totalorder %s176, %s178
    %p185 = scmp.eq.s32.totalorder %s32, 1
    %p186 = por %p184, %p185
    %p187 = scmp.ne.s32.totalorder %s178, %s179
    %p188 = scmp.eq.s32.totalorder %s32, 0
    %p189 = por %p187, %p188
    %p190 = scmp.ne.s32.totalorder %s178, %s179
    %p191 = scmp.eq.s32.totalorder %s33, 1
    %p192 = por %p190, %p191
    %p194 = scmp.ne.s32.totalorder %s179, %s193
    %p195 = scmp.eq.s32.totalorder %s33, 0
    %p196 = por %p194, %p195
    %s198 = sadd.s32 %s197, 1
    %p201 = scmp.eq.s32.totalorder %s27, 1
    %p202 = scmp.ne.s32.totalorder %s197, %s199
    %p203 = scmp.eq.s32.totalorder %s27, 0
    %p204 = por %p202, %p203
    %p205 = scmp.ne.s32.totalorder %s197, %s199
    %p206 = scmp.eq.s32.totalorder %s32, 1
    %p207 = por %p205, %p206
    %p208 = scmp.ne.s32.totalorder %s199, %s200
    %p209 = scmp.eq.s32.totalorder %s32, 0
    %p210 = por %p208, %p209
    %p211 = scmp.ne.s32.totalorder %s199, %s200
    %p212 = scmp.eq.s32.totalorder %s33, 1
    %p213 = por %p211, %p212
    %p215 = scmp.ne.s32.totalorder %s200, %s214
    %p216 = scmp.eq.s32.totalorder %s33, 0
    %p217 = por %p215, %p216
    %s219 = sadd.s32 %s218, 1
    %p222 = scmp.eq.s32.totalorder %s27, 1
    %p223 = scmp.ne.s32.totalorder %s218, %s220
    %p224 = scmp.eq.s32.totalorder %s27, 0
    %p225 = por %p223, %p224
    %p226 = scmp.ne.s32.totalorder %s218, %s220
    %p227 = scmp.eq.s32.totalorder %s32, 1
    %p228 = por %p226, %p227
    %p229 = scmp.ne.s32.totalorder %s220, %s221
    %p230 = scmp.eq.s32.totalorder %s32, 0
    %p231 = por %p229, %p230
    %p232 = scmp.ne.s32.totalorder %s220, %s221
    %p233 = scmp.eq.s32.totalorder %s33, 1
    %p234 = por %p232, %p233
    %p236 = scmp.ne.s32.totalorder %s221, %s235
    %p237 = scmp.eq.s32.totalorder %s33, 0
    %p238 = por %p236, %p237
    %s240 = sadd.s32 %s239, 1
    %p243 = scmp.eq.s32.totalorder %s27, 1
    %p244 = scmp.ne.s32.totalorder %s239, %s241
    %p245 = scmp.eq.s32.totalorder %s27, 0
    %p246 = por %p244, %p245
    %p247 = scmp.ne.s32.totalorder %s239, %s241
    %p248 = scmp.eq.s32.totalorder %s32, 1
    %p249 = por %p247, %p248
    %p250 = scmp.ne.s32.totalorder %s241, %s242
    %p251 = scmp.eq.s32.totalorder %s32, 0
    %p252 = por %p250, %p251
    %p253 = scmp.ne.s32.totalorder %s241, %s242
    %p254 = scmp.eq.s32.totalorder %s33, 1
    %p255 = por %p253, %p254
    %p257 = scmp.ne.s32.totalorder %s242, %s256
    %p258 = scmp.eq.s32.totalorder %s33, 0
    %p259 = por %p257, %p258
    %s261 = sadd.s32 %s260, 1
    %p264 = scmp.eq.s32.totalorder %s27, 1
    %p265 = scmp.ne.s32.totalorder %s260, %s262
    %p266 = scmp.eq.s32.totalorder %s27, 0
    %p267 = por %p265, %p266
    %p268 = scmp.ne.s32.totalorder %s260, %s262
    %p269 = scmp.eq.s32.totalorder %s32, 1
    %p270 = por %p268, %p269
    %p271 = scmp.ne.s32.totalorder %s262, %s263
    %p272 = scmp.eq.s32.totalorder %s32, 0
    %p273 = por %p271, %p272
    %p274 = scmp.ne.s32.totalorder %s262, %s263
    %p275 = scmp.eq.s32.totalorder %s33, 1
    %p276 = por %p274, %p275
    %p278 = scmp.ne.s32.totalorder %s263, %s277
    %p279 = scmp.eq.s32.totalorder %s33, 0
    %p280 = por %p278, %p279
    %s282 = sadd.s32 %s281, 1
    %p285 = scmp.eq.s32.totalorder %s27, 1
    %p286 = scmp.ne.s32.totalorder %s281, %s283
    %p287 = scmp.eq.s32.totalorder %s27, 0
    %p288 = por %p286, %p287
    %p289 = scmp.ne.s32.totalorder %s281, %s283
    %p290 = scmp.eq.s32.totalorder %s32, 1
    %p291 = por %p289, %p290
    %p292 = scmp.ne.s32.totalorder %s283, %s284
    %p293 = scmp.eq.s32.totalorder %s32, 0
    %p294 = por %p292, %p293
    %p295 = scmp.ne.s32.totalorder %s283, %s284
    %p296 = scmp.eq.s32.totalorder %s33, 1
    %p297 = por %p295, %p296
    %p299 = scmp.ne.s32.totalorder %s284, %s298
    %p300 = scmp.eq.s32.totalorder %s33, 0
    %p301 = por %p299, %p300
    %s303 = sadd.s32 %s302, 1
    %p306 = scmp.eq.s32.totalorder %s27, 1
    %p307 = scmp.ne.s32.totalorder %s302, %s304
    %p308 = scmp.eq.s32.totalorder %s27, 0
    %p309 = por %p307, %p308
    %p310 = scmp.ne.s32.totalorder %s302, %s304
    %p311 = scmp.eq.s32.totalorder %s32, 1
    %p312 = por %p310, %p311
    %p313 = scmp.ne.s32.totalorder %s304, %s305
    %p314 = scmp.eq.s32.totalorder %s32, 0
    %p315 = por %p313, %p314
    %p316 = scmp.ne.s32.totalorder %s304, %s305
    %p317 = scmp.eq.s32.totalorder %s33, 1
    %p318 = por %p316, %p317
    %p320 = scmp.ne.s32.totalorder %s305, %s319
    %p321 = scmp.eq.s32.totalorder %s33, 0
    %p322 = por %p320, %p321
    %s324 = sadd.s32 %s323, 1
    %p327 = scmp.eq.s32.totalorder %s27, 1
    %p328 = scmp.ne.s32.totalorder %s323, %s325
    %p329 = scmp.eq.s32.totalorder %s27, 0
    %p330 = por %p328, %p329
    %p331 = scmp.ne.s32.totalorder %s323, %s325
    %p332 = scmp.eq.s32.totalorder %s32, 1
    %p333 = por %p331, %p332
    %p334 = scmp.ne.s32.totalorder %s325, %s326
    %p335 = scmp.eq.s32.totalorder %s32, 0
    %p336 = por %p334, %p335
    %p337 = scmp.ne.s32.totalorder %s325, %s326
    %p338 = scmp.eq.s32.totalorder %s33, 1
    %p339 = por %p337, %p338
    %p341 = scmp.ne.s32.totalorder %s326, %s340
    %p342 = scmp.eq.s32.totalorder %s33, 0
    %p343 = por %p341, %p342
    %s345 = sadd.s32 %s344, 1
    %p348 = scmp.eq.s32.totalorder %s27, 1
    %p349 = scmp.ne.s32.totalorder %s344, %s346
    %p350 = scmp.eq.s32.totalorder %s27, 0
    %p351 = por %p349, %p350
    %p352 = scmp.ne.s32.totalorder %s344, %s346
    %p353 = scmp.eq.s32.totalorder %s32, 1
    %p354 = por %p352, %p353
    %p355 = scmp.ne.s32.totalorder %s346, %s347
    %p356 = scmp.eq.s32.totalorder %s32, 0
    %p357 = por %p355, %p356
    %p358 = scmp.ne.s32.totalorder %s346, %s347
    %p359 = scmp.eq.s32.totalorder %s33, 1
    %p360 = por %p358, %p359
    %p362 = scmp.ne.s32.totalorder %s347, %s361
    %p363 = scmp.eq.s32.totalorder %s33, 0
    %p364 = por %p362, %p363
    %s366 = sadd.s32 %s365, 1
    %p369 = scmp.eq.s32.totalorder %s27, 1
    %p370 = scmp.ne.s32.totalorder %s365, %s367
    %p371 = scmp.eq.s32.totalorder %s27, 0
    %p372 = por %p370, %p371
    %p373 = scmp.ne.s32.totalorder %s365, %s367
    %p374 = scmp.eq.s32.totalorder %s32, 1
    %p375 = por %p373, %p374
    %p376 = scmp.ne.s32.totalorder %s367, %s368
    %p377 = scmp.eq.s32.totalorder %s32, 0
    %p378 = por %p376, %p377
    %p379 = scmp.ne.s32.totalorder %s367, %s368
    %p380 = scmp.eq.s32.totalorder %s33, 1
    %p381 = por %p379, %p380
    %p383 = scmp.ne.s32.totalorder %s368, %s382
    %p384 = scmp.eq.s32.totalorder %s33, 0
    %p385 = por %p383, %p384
    %s387 = sadd.s32 %s386, 1
    %p390 = scmp.eq.s32.totalorder %s27, 1
    %p391 = scmp.ne.s32.totalorder %s386, %s388
    %p392 = scmp.eq.s32.totalorder %s27, 0
    %p393 = por %p391, %p392
    %p394 = scmp.ne.s32.totalorder %s386, %s388
    %p395 = scmp.eq.s32.totalorder %s32, 1
    %p396 = por %p394, %p395
    %p397 = scmp.ne.s32.totalorder %s388, %s389
    %p398 = scmp.eq.s32.totalorder %s32, 0
    %p399 = por %p397, %p398
    %p400 = scmp.ne.s32.totalorder %s388, %s389
    %p401 = scmp.eq.s32.totalorder %s33, 1
    %p402 = por %p400, %p401
    %p404 = scmp.ne.s32.totalorder %s389, %s403
    %p405 = scmp.eq.s32.totalorder %s33, 0
    %p406 = por %p404, %p405
    %s408 = sadd.s32 %s407, 1
    %p411 = scmp.eq.s32.totalorder %s27, 1
    %p412 = scmp.ne.s32.totalorder %s407, %s409
    %p413 = scmp.eq.s32.totalorder %s27, 0
    %p414 = por %p412, %p413
    %p415 = scmp.ne.s32.totalorder %s407, %s409
    %p416 = scmp.eq.s32.totalorder %s32, 1
    %p417 = por %p415, %p416
    %p418 = scmp.ne.s32.totalorder %s409, %s410
    %p419 = scmp.eq.s32.totalorder %s32, 0
    %p420 = por %p418, %p419
    %p421 = scmp.ne.s32.totalorder %s409, %s410
    %p422 = scmp.eq.s32.totalorder %s33, 1
    %p423 = por %p421, %p422
    %p425 = scmp.ne.s32.totalorder %s410, %s424
    %p426 = scmp.eq.s32.totalorder %s33, 0
    %p427 = por %p425, %p426
    %s429 = sadd.s32 %s428, 1
    %p432 = scmp.eq.s32.totalorder %s27, 1
    %p433 = scmp.ne.s32.totalorder %s428, %s430
    %p434 = scmp.eq.s32.totalorder %s27, 0
    %p435 = por %p433, %p434
    %p436 = scmp.ne.s32.totalorder %s428, %s430
    %p437 = scmp.eq.s32.totalorder %s32, 1
    %p438 = por %p436, %p437
    %p439 = scmp.ne.s32.totalorder %s430, %s431
    %p440 = scmp.eq.s32.totalorder %s32, 0
    %p441 = por %p439, %p440
    %p442 = scmp.ne.s32.totalorder %s430, %s431
    %p443 = scmp.eq.s32.totalorder %s33, 1
    %p444 = por %p442, %p443
    %p446 = scmp.ne.s32.totalorder %s431, %s445
    %p447 = scmp.eq.s32.totalorder %s33, 0
    %p448 = por %p446, %p447
    %s450 = sadd.s32 %s449, 1
    %p453 = scmp.eq.s32.totalorder %s27, 1
    %p454 = scmp.ne.s32.totalorder %s449, %s451
    %p455 = scmp.eq.s32.totalorder %s27, 0
    %p456 = por %p454, %p455
    %p457 = scmp.ne.s32.totalorder %s449, %s451
    %p458 = scmp.eq.s32.totalorder %s32, 1
    %p459 = por %p457, %p458
    %p460 = scmp.ne.s32.totalorder %s451, %s452
    %p461 = scmp.eq.s32.totalorder %s32, 0
    %p462 = por %p460, %p461
    %p463 = scmp.ne.s32.totalorder %s451, %s452
    %p464 = scmp.eq.s32.totalorder %s33, 1
    %p465 = por %p463, %p464
    %p467 = scmp.ne.s32.totalorder %s452, %s466
    %p468 = scmp.eq.s32.totalorder %s33, 0
    %p469 = por %p467, %p468
    %s471 = sadd.s32 %s470, 1
    %p474 = scmp.eq.s32.totalorder %s27, 1
    %p475 = scmp.ne.s32.totalorder %s470, %s472
    %p476 = scmp.eq.s32.totalorder %s27, 0
    %p477 = por %p475, %p476
    %p478 = scmp.ne.s32.totalorder %s470, %s472
    %p479 = scmp.eq.s32.totalorder %s32, 1
    %p480 = por %p478, %p479
    %p481 = scmp.ne.s32.totalorder %s472, %s473
    %p482 = scmp.eq.s32.totalorder %s32, 0
    %p483 = por %p481, %p482
    %p484 = scmp.ne.s32.totalorder %s472, %s473
    %p485 = scmp.eq.s32.totalorder %s33, 1
    %p486 = por %p484, %p485
    %p488 = scmp.ne.s32.totalorder %s473, %s487
    %p489 = scmp.eq.s32.totalorder %s33, 0
    %p490 = por %p488, %p489
    %s491 = ssub.s32 %s27, %s34
    %p492 = scmp.eq.s32.totalorder %s491, 0
    %s494 = sadd.s32 %s493, 1
    %s495 = scalar_select %p492, %s493, %s494
    %p498 = pneg %p492
    %p499 = scmp.eq.s32.totalorder %s27, 1
    %p500 = por %p498, %p499
    %p501 = scmp.ne.s32.totalorder %s493, %s496
    %p502 = scmp.eq.s32.totalorder %s27, 0
    %p503 = por %p501, %p502
    %p504 = scmp.ne.s32.totalorder %s493, %s496
    %p505 = scmp.eq.s32.totalorder %s32, 1
    %p506 = por %p504, %p505
    %p507 = scmp.ne.s32.totalorder %s496, %s497
    %p508 = scmp.eq.s32.totalorder %s32, 0
    %p509 = por %p507, %p508
    %p510 = scmp.ne.s32.totalorder %s496, %s497
    %p511 = scmp.eq.s32.totalorder %s33, 1
    %p512 = por %p510, %p511
    %p514 = scmp.ne.s32.totalorder %s497, %s513
    %p515 = scmp.eq.s32.totalorder %s33, 0
    %p516 = por %p514, %p515
    %p517 = scmp.le.s32.totalorder 1, %s27
    %p518 = scmp.lt.s32.totalorder %s27, 3
    %p519 = pnand %p517, %p518
    %p520 = pneg %p519
    // Predicated region
    $region9: #{up_block2_forward.1} parent=5 // pred_check
      _
    $region10: #{up_block2_forward.1} parent=5 // pred_check_branch
      %522 = sbr.rel (%p519) target = $region12
    $region11: #{up_block2_forward.1} parent=5 // pred_region
      %s523 = ssub.s32 %s27, 1
      // Predicated region
      $region13: #{up_block2_forward.1} parent=11 // pred_check
        %p524 = pneg %p126
      $region14: #{up_block2_forward.1} parent=11 // pred_check_branch
        %526 = sbr.rel (%p524) target = $region16
      $region15: #{up_block2_forward.1} parent=11 // pred_region
        _
      $region16: #{up_block2_forward.1} parent=11 // pred_fallthru
        _
      // Predicated region
      $region17: #{up_block2_forward.1} parent=11 // pred_check
        %p527 = pneg %p147
      $region18: #{up_block2_forward.1} parent=11 // pred_check_branch
        %529 = sbr.rel (%p527) target = $region20
      $region19: #{up_block2_forward.1} parent=11 // pred_region
        _
      $region20: #{up_block2_forward.1} parent=11 // pred_fallthru
        _
      // Predicated region
      $region21: #{up_block2_forward.1} parent=11 // pred_check
        %p530 = pneg %p168
      $region22: #{up_block2_forward.1} parent=11 // pred_check_branch
        %532 = sbr.rel (%p530) target = $region24
      $region23: #{up_block2_forward.1} parent=11 // pred_region
        _
      $region24: #{up_block2_forward.1} parent=11 // pred_fallthru
        _
      // Predicated region
      $region25: #{up_block2_forward.1} parent=11 // pred_check
        %p533 = pneg %p189
      $region26: #{up_block2_forward.1} parent=11 // pred_check_branch
        %535 = sbr.rel (%p533) target = $region28
      $region27: #{up_block2_forward.1} parent=11 // pred_region
        _
      $region28: #{up_block2_forward.1} parent=11 // pred_fallthru
        _
      // Predicated region
      $region29: #{up_block2_forward.1} parent=11 // pred_check
        %p536 = pneg %p210
      $region30: #{up_block2_forward.1} parent=11 // pred_check_branch
        %538 = sbr.rel (%p536) target = $region32
      $region31: #{up_block2_forward.1} parent=11 // pred_region
        _
      $region32: #{up_block2_forward.1} parent=11 // pred_fallthru
        _
      // Predicated region
      $region33: #{up_block2_forward.1} parent=11 // pred_check
        %p539 = pneg %p231
      $region34: #{up_block2_forward.1} parent=11 // pred_check_branch
        %541 = sbr.rel (%p539) target = $region36
      $region35: #{up_block2_forward.1} parent=11 // pred_region
        _
      $region36: #{up_block2_forward.1} parent=11 // pred_fallthru
        _
      // Predicated region
      $region37: #{up_block2_forward.1} parent=11 // pred_check
        %p542 = pneg %p252
      $region38: #{up_block2_forward.1} parent=11 // pred_check_branch
        %544 = sbr.rel (%p542) target = $region40
      $region39: #{up_block2_forward.1} parent=11 // pred_region
        _
      $region40: #{up_block2_forward.1} parent=11 // pred_fallthru
        _
      // Predicated region
      $region41: #{up_block2_forward.1} parent=11 // pred_check
        %p545 = pneg %p273
      $region42: #{up_block2_forward.1} parent=11 // pred_check_branch
        %547 = sbr.rel (%p545) target = $region44
      $region43: #{up_block2_forward.1} parent=11 // pred_region
        _
      $region44: #{up_block2_forward.1} parent=11 // pred_fallthru
        _
      // Predicated region
      $region45: #{up_block2_forward.1} parent=11 // pred_check
        %p548 = pneg %p294
      $region46: #{up_block2_forward.1} parent=11 // pred_check_branch
        %550 = sbr.rel (%p548) target = $region48
      $region47: #{up_block2_forward.1} parent=11 // pred_region
        _
      $region48: #{up_block2_forward.1} parent=11 // pred_fallthru
        _
      // Predicated region
      $region49: #{up_block2_forward.1} parent=11 // pred_check
        %p551 = pneg %p315
      $region50: #{up_block2_forward.1} parent=11 // pred_check_branch
        %553 = sbr.rel (%p551) target = $region52
      $region51: #{up_block2_forward.1} parent=11 // pred_region
        _
      $region52: #{up_block2_forward.1} parent=11 // pred_fallthru
        _
      // Predicated region
      $region53: #{up_block2_forward.1} parent=11 // pred_check
        %p554 = pneg %p336
      $region54: #{up_block2_forward.1} parent=11 // pred_check_branch
        %556 = sbr.rel (%p554) target = $region56
      $region55: #{up_block2_forward.1} parent=11 // pred_region
        _
      $region56: #{up_block2_forward.1} parent=11 // pred_fallthru
        _
      // Predicated region
      $region57: #{up_block2_forward.1} parent=11 // pred_check
        %p557 = pneg %p357
      $region58: #{up_block2_forward.1} parent=11 // pred_check_branch
        %559 = sbr.rel (%p557) target = $region60
      $region59: #{up_block2_forward.1} parent=11 // pred_region
        _
      $region60: #{up_block2_forward.1} parent=11 // pred_fallthru
        _
      // Predicated region
      $region61: #{up_block2_forward.1} parent=11 // pred_check
        %p560 = pneg %p378
      $region62: #{up_block2_forward.1} parent=11 // pred_check_branch
        %562 = sbr.rel (%p560) target = $region64
      $region63: #{up_block2_forward.1} parent=11 // pred_region
        _
      $region64: #{up_block2_forward.1} parent=11 // pred_fallthru
        _
      // Predicated region
      $region65: #{up_block2_forward.1} parent=11 // pred_check
        %p563 = pneg %p399
      $region66: #{up_block2_forward.1} parent=11 // pred_check_branch
        %565 = sbr.rel (%p563) target = $region68
      $region67: #{up_block2_forward.1} parent=11 // pred_region
        _
      $region68: #{up_block2_forward.1} parent=11 // pred_fallthru
        _
      // Predicated region
      $region69: #{up_block2_forward.1} parent=11 // pred_check
        %p566 = pneg %p420
      $region70: #{up_block2_forward.1} parent=11 // pred_check_branch
        %568 = sbr.rel (%p566) target = $region72
      $region71: #{up_block2_forward.1} parent=11 // pred_region
        _
      $region72: #{up_block2_forward.1} parent=11 // pred_fallthru
        _
      // Predicated region
      $region73: #{up_block2_forward.1} parent=11 // pred_check
        %p569 = pneg %p441
      $region74: #{up_block2_forward.1} parent=11 // pred_check_branch
        %571 = sbr.rel (%p569) target = $region76
      $region75: #{up_block2_forward.1} parent=11 // pred_region
        _
      $region76: #{up_block2_forward.1} parent=11 // pred_fallthru
        _
      // Predicated region
      $region77: #{up_block2_forward.1} parent=11 // pred_check
        %p572 = pneg %p462
      $region78: #{up_block2_forward.1} parent=11 // pred_check_branch
        %574 = sbr.rel (%p572) target = $region80
      $region79: #{up_block2_forward.1} parent=11 // pred_region
        _
      $region80: #{up_block2_forward.1} parent=11 // pred_fallthru
        _
      // Predicated region
      $region81: #{up_block2_forward.1} parent=11 // pred_check
        %p575 = pneg %p483
      $region82: #{up_block2_forward.1} parent=11 // pred_check_branch
        %577 = sbr.rel (%p575) target = $region84
      $region83: #{up_block2_forward.1} parent=11 // pred_region
        _
      $region84: #{up_block2_forward.1} parent=11 // pred_fallthru
        _
    $region12: #{up_block2_forward.1} parent=5 // pred_fallthru
      _
    %p578 = scmp.lt.s32.totalorder %s27, 2
    // Predicated region
    $region85: #{up_block2_forward.1} parent=5 // pred_check
      %p579 = pneg %p578
    $region86: #{up_block2_forward.1} parent=5 // pred_check_branch
      %581 = sbr.rel (%p579) target = $region88
    $region87: #{up_block2_forward.1} parent=5 // pred_region
      // Predicated region
      $region89: #{up_block2_forward.1} parent=87 // pred_check
        %p582 = pneg %p47
      $region90: #{up_block2_forward.1} parent=87 // pred_check_branch
        %584 = sbr.rel (%p582) target = $region92
      $region91: #{up_block2_forward.1} parent=87 // pred_region
        %p585 = scmp.lt.s32.totalorder %s27, 1
        %s586 = scalar_select %p585, %s27, 1
        %s587 = smul.addr %s586, 8
        %s588 = scalar_lea.vmem %s0, %s587
      $region92: #{up_block2_forward.1} parent=87 // pred_fallthru
        _
      // Predicated region
      $region93: #{up_block2_forward.1} parent=87 // pred_check
        %p589 = pneg %p73
      $region94: #{up_block2_forward.1} parent=87 // pred_check_branch
        %591 = sbr.rel (%p589) target = $region96
      $region95: #{up_block2_forward.1} parent=87 // pred_region
        %p592 = scmp.lt.s32.totalorder %s27, 1
        %s593 = scalar_select %p592, %s27, 1
        %s594 = smul.addr %s593, 8
        %s595 = scalar_lea.vmem %s1, %s594
      $region96: #{up_block2_forward.1} parent=87 // pred_fallthru
        _
      // Predicated region
      $region97: #{up_block2_forward.1} parent=87 // pred_check
        %p596 = pneg %p99
      $region98: #{up_block2_forward.1} parent=87 // pred_check_branch
        %598 = sbr.rel (%p596) target = $region100
      $region99: #{up_block2_forward.1} parent=87 // pred_region
        %p599 = scmp.lt.s32.totalorder %s27, 1
        %s600 = scalar_select %p599, %s27, 1
        %s601 = smul.addr %s600, 2
        %s602 = smul.addr %s601, 8
        %s603 = scalar_lea.vmem %s2, %s602
      $region100: #{up_block2_forward.1} parent=87 // pred_fallthru
        _
    $region88: #{up_block2_forward.1} parent=5 // pred_fallthru
      _
    %p604 = scmp.le.s32.totalorder 1, %s27
    %p605 = scmp.lt.s32.totalorder %s27, 3
    %p606 = pnand %p604, %p605
    %p607 = pneg %p606
    // Predicated region
    $region101: #{up_block2_forward.1} parent=5 // pred_check
      _
    $region102: #{up_block2_forward.1} parent=5 // pred_check_branch
      %609 = sbr.rel (%p606) target = $region104
    $region103: #{up_block2_forward.1} parent=5 // pred_region
      %s610 = ssub.s32 %s27, 1
      %p611 = scmp.lt.s32.totalorder %s32, 1
      %s612 = scalar_select %p611, %s32, 1
      %s613 = smul.addr %s612, 8
      %s614 = scalar_lea.vmem %s0, %s613
      %p615 = pneg %p53
      %p616 = pneg %p50
      %p617 = scmp.lt.s32.totalorder %s32, 1
      %s618 = scalar_select %p617, %s32, 1
      %s619 = smul.addr %s618, 8
      %s620 = scalar_lea.vmem %s1, %s619
      %p621 = pneg %p79
      %p622 = pneg %p76
      %p623 = scmp.lt.s32.totalorder %s32, 1
      %s624 = scalar_select %p623, %s32, 1
      %s625 = smul.addr %s624, 2
      %s626 = smul.addr %s625, 8
      %s627 = scalar_lea.vmem %s2, %s626
      %p628 = pneg %p105
      %p629 = pneg %p102
      %p630 = pneg %p126
      %p631 = pneg %p123
      %p632 = pneg %p147
      %p633 = pneg %p144
      %p634 = pneg %p168
      %p635 = pneg %p165
      %p636 = pneg %p189
      %p637 = pneg %p186
      %p638 = pneg %p210
      %p639 = pneg %p207
      %p640 = pneg %p231
      %p641 = pneg %p228
      %p642 = pneg %p252
      %p643 = pneg %p249
      %p644 = pneg %p273
      %p645 = pneg %p270
      %p646 = pneg %p294
      %p647 = pneg %p291
      %p648 = pneg %p315
      %p649 = pneg %p312
      %p650 = pneg %p336
      %p651 = pneg %p333
      %p652 = pneg %p357
      %p653 = pneg %p354
      %p654 = pneg %p378
      %p655 = pneg %p375
      %p656 = pneg %p399
      %p657 = pneg %p396
      %p658 = pneg %p420
      %p659 = pneg %p417
      %p660 = pneg %p441
      %p661 = pneg %p438
      %p662 = pneg %p462
      %p663 = pneg %p459
      %p664 = pneg %p483
      %p665 = pneg %p480
      %p666 = pneg %p509
      %p667 = pneg %p506
      %p668 = scmp.lt.s32.totalorder %s32, 1
      %s669 = scalar_select %p668, %s32, 1
      %s670 = smul.addr %s669, 2
      %s671 = smul.addr %s670, 8
      %s672 = scalar_lea.vmem %s21, %s671
      %p673 = scmp.lt.s32.totalorder %s32, 1
      %s674 = scalar_select %p673, %s32, 1
      %s675 = smul.addr %s674, 8
      %s676 = scalar_lea.vmem %s0, %s675
      %p677 = scmp.lt.s32.totalorder %s32, 1
      %s678 = scalar_select %p677, %s32, 1
      %s679 = smul.addr %s678, 8
      %s680 = scalar_lea.vmem %s1, %s679
      %p681 = scmp.lt.s32.totalorder %s32, 1
      %s682 = scalar_select %p681, %s32, 1
      %s683 = smul.addr %s682, 2
      %s684 = smul.addr %s683, 8
      %s685 = scalar_lea.vmem %s2, %s684
      %p686 = scmp.lt.s32.totalorder %s32, 1
      %s687 = scalar_select %p686, %s32, 1
      %s688 = smul.addr %s687, 2
      %s689 = smul.addr %s688, 8
      %s690 = scalar_lea.vmem %s21, %s689
      %v691 = vld [vmem:[%s4] sm:$0xff]
      %v692 = vld [vmem:[%s4 + $0x8] sm:$0xff]
      %v693 = vld [vmem:[%s4 + $0x10] sm:$0x1]
      %v694 = vld [vmem:[%s4 + $0x18] sm:$0x1]
      %v695 = vld [vmem:[%s676] sm:$0xff]
      %v696 = vld [vmem:[%s5] sm:$0xff]
      %698 = vset.pattern.permute.xlu0 0
      %699 = vperm.xlu0 %698, %v695
      %v700 = vpop.permute.xlu0 %699
      %v702 = vmul.f32 %v696, %v700
      %vm703 = vcmask 64512
      %v704 = vsel %vm703, %v702, 0.0
      %v705 = vrot.slane %v704, 4
      %v706 = vadd.f32 %v704, %v705
      %v707 = vrot.slane %v706, 2
      %v708 = vadd.f32 %v706, %v707
      %v709 = vrot.slane %v708, 1
      %v710 = vadd.f32 %v708, %v709
      %v711 = vld [vmem:[%s6] sm:$0x1]
      %v712 = vadd.f32 %v710, %v711
      %v713 = vxor.u32 %v712, 2147483648
      %v714 = vmul.f32 %v713, 1.442695
      %v715 = vpow.pop %v714
      %v716 = vadd.f32 %v715, 1.0
      %v717 = vrcp.pop %v716
      %v718 = vmul.f32 1.0, %v717
      %v719 = vmul.f32 %v712, %v718
      %v720 = vld [vmem:[%s7] sm:$0xff]
      %v721 = vlaneseq
      %v722 = vshrl.u32 %v721, 7
      %v723 = vsub.s32 0, %v722
      %v724 = vrot.slane %v719, %v723
      %v725 = vmul.f32 %v720, %v724
      %v726 = vsel %vm703, %v725, 0.0
      %727 = vadd.xlane.f32.xlu0 %v726
      %v728 = vpop.xlane.xlu0 %727
      %v729 = vld [vmem:[%s8] sm:$0xff]
      %v730 = vadd.f32 %v728, %v729
      %v731 = vld [vmem:[%s680] sm:$0xff]
      %733 = vset.pattern.permute.xlu0 0
      %734 = vperm.xlu0 %733, %v730
      %v735 = vpop.permute.xlu0 %734
      %v737 = vadd.f32 %v731, %v735
      %v738 = vld [vmem:[%s3] sm:$0xff]
      %v739 = vld [vmem:[%s3 + $0x8] sm:$0xff]
      %v740 = vld [vmem:[%s3 + $0x10] sm:$0xff]
      %v741 = vld [vmem:[%s3 + $0x18] sm:$0xff]
      %v742 = vld [vmem:[%s3 + $0x20] sm:$0xff]
      %v743 = vld [vmem:[%s3 + $0x28] sm:$0xff]
      %v744 = vld [vmem:[%s3 + $0x30] sm:$0xff]
      %v745 = vld [vmem:[%s3 + $0x38] sm:$0xff]
      %v746 = vld [vmem:[%s3 + $0x40] sm:$0xff]
      %v747 = vld [vmem:[%s3 + $0x48] sm:$0xff]
      %v748 = vld [vmem:[%s3 + $0x50] sm:$0xff]
      %v749 = vld [vmem:[%s3 + $0x58] sm:$0xff]
      %v750 = vld [vmem:[%s3 + $0x60] sm:$0xff]
      %v751 = vld [vmem:[%s3 + $0x68] sm:$0xff]
      %v752 = vld [vmem:[%s3 + $0x70] sm:$0xff]
      %v753 = vld [vmem:[%s3 + $0x78] sm:$0xff]
      %vm754 = vcmask 523264
      %v756 = vsel %vm754, %v737, 0
      %758 = vmatprep.subr.mxu0 %v739
      %759 = vmatpush1.msra.mxu0 %v738
      %760 = vmatprep.subr.mxu0 %v741
      %761 = vmatpush1.msra.mxu0 %v740
      %762 = vmatprep.subr.mxu0 %v743
      %763 = vmatpush1.msra.mxu0 %v742
      %764 = vmatprep.subr.mxu0 %v745
      %765 = vmatpush1.msra.mxu0 %v744
      %766 = vmatprep.subr.mxu0 %v747
      %767 = vmatpush1.msra.mxu0 %v746
      %768 = vmatprep.subr.mxu0 %v749
      %769 = vmatpush1.msra.mxu0 %v748
      %770 = vmatprep.subr.mxu0 %v751
      %771 = vmatpush1.msra.mxu0 %v750
      %772 = vmatprep.subr.mxu0 %v753
      %773 = vmatpush1.msra.mxu0 %v752
      %774 = vmatprep.subr.mxu0 0.0
      %775 = vmatpush1.msra.mxu0 0.0
      %776 = vmatprep.subr.mxu0 0.0
      %777 = vmatpush1.msra.mxu0 0.0
      %778 = vmatprep.subr.mxu0 0.0
      %779 = vmatpush1.msra.mxu0 0.0
      %780 = vmatprep.subr.mxu0 0.0
      %781 = vmatpush1.msra.mxu0 0.0
      %782 = vmatprep.subr.mxu0 0.0
      %783 = vmatpush1.msra.mxu0 0.0
      %784 = vmatprep.subr.mxu0 0.0
      %785 = vmatpush1.msra.mxu0 0.0
      %786 = vmatprep.subr.mxu0 0.0
      %787 = vmatpush1.msra.mxu0 0.0
      %788 = vmatprep.subr.mxu0 0.0
      %789 = vmatpush1.msra.mxu0 0.0
      %790 = vmatprep.subr.mxu0 0.0
      %791 = vmatpush1.msra.mxu0 0.0
      %792 = vmatprep.subr.mxu0 0.0
      %793 = vmatpush1.msra.mxu0 0.0
      %794 = vmatprep.subr.mxu0 0.0
      %795 = vmatpush1.msra.mxu0 0.0
      %796 = vmatprep.subr.mxu0 0.0
      %797 = vmatpush1.msra.mxu0 0.0
      %798 = vmatprep.subr.mxu0 0.0
      %799 = vmatpush1.msra.mxu0 0.0
      %800 = vmatprep.subr.mxu0 0.0
      %801 = vmatpush1.msra.mxu0 0.0
      %802 = vmatprep.subr.mxu0 0.0
      %803 = vmatpush1.msra.mxu0 0.0
      %804 = vmatprep.subr.mxu0 0.0
      %805 = vmatpush1.msra.mxu0 0.0
      %806 = vmatprep.subr.mxu0 0.0
      %807 = vmatpush1.msra.mxu0 0.0
      %808 = vmatprep.subr.mxu0 0.0
      %809 = vmatpush1.msra.mxu0 0.0
      %810 = vmatprep.subr.mxu0 0.0
      %811 = vmatpush1.msra.mxu0 0.0
      %812 = vmatprep.subr.mxu0 0.0
      %813 = vmatpush1.msra.mxu0 0.0
      %814 = vmatprep.subr.mxu0 0.0
      %815 = vmatpush1.msra.mxu0 0.0
      %816 = vmatprep.subr.mxu0 0.0
      %817 = vmatpush1.msra.mxu0 0.0
      %818 = vmatprep.subr.mxu0 0.0
      %819 = vmatpush1.msra.mxu0 0.0
      %820 = vmatprep.subr.mxu0 0.0
      %821 = vmatpush1.msra.mxu0 0.0
      %822 = vmatprep.mubr.f32.mxu0 0.0
      %823 = vmatmul.mubr.f32.gmra.mrb[0].mxu0 %v756
      %v824 = vpop.f32.mrb[0].mxu0
      %v825 = vadd.f32 0.0, %v824
      %v826 = vpop.f32.mrb[0].mxu0
      %v827 = vadd.f32 0.0, %v826
      %828 = vdwg.mxu0
      %v829 = vld [vmem:[%s9] sm:$0xff]
      %v830 = vld [vmem:[%s10] sm:$0xff]
      %831 = vrot.lane.b32.xlu0 %v825, 17
      %v832 = vpop.permute.xlu0 %831
      %833 = vrot.lane.b32.xlu0 %v827, 17
      %v834 = vpop.permute.xlu0 %833
      %v835 = vlaneseq
      %v836 = vand.u32 %v835, 127
      %vm837 = vcmp.lt.s32.totalorder %v836, 17
      %v838 = vsel %vm837, %v832, %v834
      %v839 = vsel %vm837, %v834, %v832
      %v840 = vlaneseq
      %v841 = vshrl.u32 %v840, 7
      %v842 = vsub.s32 0, %v841
      %v843 = vrot.slane %v691, %v842
      %v844 = vlaneseq
      %v845 = vshrl.u32 %v844, 7
      %v846 = vsub.s32 0, %v845
      %v847 = vrot.slane %v692, %v846
      %v848 = vmul.f32 %v839, %v843
      %v849 = vmul.f32 %v838, %v847
      %850 = vrot.lane.b32.xlu0 %v825, 16
      %v851 = vpop.permute.xlu0 %850
      %852 = vrot.lane.b32.xlu0 %v827, 16
      %v853 = vpop.permute.xlu0 %852
      %vm854 = vcmp.lt.s32.totalorder %v836, 16
      %v855 = vsel %vm854, %v851, %v853
      %v856 = vsel %vm854, %v853, %v851
      %v857 = vlaneseq
      %v858 = vshrl.u32 %v857, 7
      %v859 = vsub.s32 1, %v858
      %v860 = vrot.slane %v691, %v859
      %v861 = vlaneseq
      %v862 = vshrl.u32 %v861, 7
      %v863 = vsub.s32 1, %v862
      %v864 = vrot.slane %v692, %v863
      %v865 = vmul.f32 %v856, %v860
      %v866 = vmul.f32 %v855, %v864
      %867 = vrot.lane.b32.xlu0 %v825, 15
      %v868 = vpop.permute.xlu0 %867
      %869 = vrot.lane.b32.xlu0 %v827, 15
      %v870 = vpop.permute.xlu0 %869
      %vm871 = vcmp.lt.s32.totalorder %v836, 15
      %v872 = vsel %vm871, %v868, %v870
      %v873 = vsel %vm871, %v870, %v868
      %v874 = vlaneseq
      %v875 = vshrl.u32 %v874, 7
      %v876 = vsub.s32 2, %v875
      %v877 = vrot.slane %v691, %v876
      %v878 = vlaneseq
      %v879 = vshrl.u32 %v878, 7
      %v880 = vsub.s32 2, %v879
      %v881 = vrot.slane %v692, %v880
      %v882 = vmul.f32 %v873, %v877
      %v883 = vmul.f32 %v872, %v881
      %884 = vrot.lane.b32.xlu0 %v825, 1
      %v885 = vpop.permute.xlu0 %884
      %886 = vrot.lane.b32.xlu0 %v827, 1
      %v887 = vpop.permute.xlu0 %886
      %vm888 = vcmp.lt.s32.totalorder %v836, 1
      %v889 = vsel %vm888, %v885, %v887
      %v890 = vsel %vm888, %v887, %v885
      %v891 = vlaneseq
      %v892 = vshrl.u32 %v891, 7
      %v893 = vsub.s32 3, %v892
      %v894 = vrot.slane %v691, %v893
      %v895 = vlaneseq
      %v896 = vshrl.u32 %v895, 7
      %v897 = vsub.s32 3, %v896
      %v898 = vrot.slane %v692, %v897
      %v899 = vmul.f32 %v890, %v894
      %v900 = vmul.f32 %v889, %v898
      %901 = vrot.lane.b32.xlu0 %v825, 127
      %v902 = vpop.permute.xlu0 %901
      %903 = vrot.lane.b32.xlu0 %v827, 127
      %v904 = vpop.permute.xlu0 %903
      %vm905 = vcmp.lt.s32.totalorder %v836, 127
      %v906 = vsel %vm905, %v902, %v904
      %v907 = vsel %vm905, %v904, %v902
      %v908 = vlaneseq
      %v909 = vshrl.u32 %v908, 7
      %v910 = vsub.s32 5, %v909
      %v911 = vrot.slane %v691, %v910
      %v912 = vlaneseq
      %v913 = vshrl.u32 %v912, 7
      %v914 = vsub.s32 5, %v913
      %v915 = vrot.slane %v692, %v914
      %v916 = vmul.f32 %v906, %v911
      %v917 = vmul.f32 %v907, %v915
      %918 = vrot.lane.b32.xlu0 %v825, 113
      %v919 = vpop.permute.xlu0 %918
      %920 = vrot.lane.b32.xlu0 %v827, 113
      %v921 = vpop.permute.xlu0 %920
      %vm922 = vcmp.lt.s32.totalorder %v836, 113
      %v923 = vsel %vm922, %v919, %v921
      %v924 = vsel %vm922, %v921, %v919
      %v925 = vlaneseq
      %v926 = vshrl.u32 %v925, 7
      %v927 = vsub.s32 6, %v926
      %v928 = vrot.slane %v691, %v927
      %v929 = vlaneseq
      %v930 = vshrl.u32 %v929, 7
      %v931 = vsub.s32 6, %v930
      %v932 = vrot.slane %v692, %v931
      %v933 = vmul.f32 %v923, %v928
      %v934 = vmul.f32 %v924, %v932
      %935 = vrot.lane.b32.xlu0 %v825, 112
      %v936 = vpop.permute.xlu0 %935
      %937 = vrot.lane.b32.xlu0 %v827, 112
      %v938 = vpop.permute.xlu0 %937
      %vm939 = vcmp.lt.s32.totalorder %v836, 112
      %v940 = vsel %vm939, %v936, %v938
      %v941 = vsel %vm939, %v938, %v936
      %v942 = vlaneseq
      %v943 = vshrl.u32 %v942, 7
      %v944 = vsub.s32 7, %v943
      %v945 = vrot.slane %v691, %v944
      %v946 = vlaneseq
      %v947 = vshrl.u32 %v946, 7
      %v948 = vsub.s32 7, %v947
      %v949 = vrot.slane %v692, %v948
      %v950 = vmul.f32 %v940, %v945
      %v951 = vmul.f32 %v941, %v949
      %952 = vrot.lane.b32.xlu0 %v825, 111
      %v953 = vpop.permute.xlu0 %952
      %954 = vrot.lane.b32.xlu0 %v827, 111
      %v955 = vpop.permute.xlu0 %954
      %vm956 = vcmp.lt.s32.totalorder %v836, 111
      %v957 = vsel %vm956, %v953, %v955
      %v958 = vsel %vm956, %v955, %v953
      %v959 = vlaneseq
      %v960 = vshrl.u32 %v959, 7
      %v961 = vsub.s32 0, %v960
      %v962 = vrot.slane %v693, %v961
      %v963 = vlaneseq
      %v964 = vshrl.u32 %v963, 7
      %v965 = vsub.s32 0, %v964
      %v966 = vrot.slane %v694, %v965
      %v967 = vmul.f32 %v957, %v962
      %v968 = vmul.f32 %v958, %v966
      %970 = vset.pattern.permute.xlu0 0
      %971 = vperm.xlu0 %970, %v830
      %v972 = vpop.permute.xlu0 %971
      %vm974 = vcmask 588800
      %v976 = vsel %vm974, %v829, 0
      %978 = vmatprep.subr.mxu0 %v849
      %979 = vmatpush1.msra.mxu0 %v848
      %980 = vmatprep.subr.mxu0 %v866
      %981 = vmatpush1.msra.mxu0 %v865
      %982 = vmatprep.subr.mxu0 %v883
      %983 = vmatpush1.msra.mxu0 %v882
      %984 = vmatprep.subr.mxu0 %v900
      %985 = vmatpush1.msra.mxu0 %v899
      %986 = vmatprep.subr.mxu0 %v827
      %987 = vmatpush1.msra.mxu0 %v825
      %988 = vmatprep.subr.mxu0 %v917
      %989 = vmatpush1.msra.mxu0 %v916
      %990 = vmatprep.subr.mxu0 %v934
      %991 = vmatpush1.msra.mxu0 %v933
      %992 = vmatprep.subr.mxu0 %v951
      %993 = vmatpush1.msra.mxu0 %v950
      %994 = vmatprep.subr.mxu0 %v968
      %995 = vmatpush1.msra.mxu0 %v967
      %996 = vmatprep.subr.mxu0 0.0
      %997 = vmatpush1.msra.mxu0 0.0
      %998 = vmatprep.subr.mxu0 0.0
      %999 = vmatpush1.msra.mxu0 0.0
      %1000 = vmatprep.subr.mxu0 0.0
      %1001 = vmatpush1.msra.mxu0 0.0
      %1002 = vmatprep.subr.mxu0 0.0
      %1003 = vmatpush1.msra.mxu0 0.0
      %1004 = vmatprep.subr.mxu0 0.0
      %1005 = vmatpush1.msra.mxu0 0.0
      %1006 = vmatprep.subr.mxu0 0.0
      %1007 = vmatpush1.msra.mxu0 0.0
      %1008 = vmatprep.subr.mxu0 0.0
      %1009 = vmatpush1.msra.mxu0 0.0
      %1010 = vmatprep.subr.mxu0 0.0
      %1011 = vmatpush1.msra.mxu0 0.0
      %1012 = vmatprep.subr.mxu0 0.0
      %1013 = vmatpush1.msra.mxu0 0.0
      %1014 = vmatprep.subr.mxu0 0.0
      %1015 = vmatpush1.msra.mxu0 0.0
      %1016 = vmatprep.subr.mxu0 0.0
      %1017 = vmatpush1.msra.mxu0 0.0
      %1018 = vmatprep.subr.mxu0 0.0
      %1019 = vmatpush1.msra.mxu0 0.0
      %1020 = vmatprep.subr.mxu0 0.0
      %1021 = vmatpush1.msra.mxu0 0.0
      %1022 = vmatprep.subr.mxu0 0.0
      %1023 = vmatpush1.msra.mxu0 0.0
      %1024 = vmatprep.subr.mxu0 0.0
      %1025 = vmatpush1.msra.mxu0 0.0
      %1026 = vmatprep.subr.mxu0 0.0
      %1027 = vmatpush1.msra.mxu0 0.0
      %1028 = vmatprep.subr.mxu0 0.0
      %1029 = vmatpush1.msra.mxu0 0.0
      %1030 = vmatprep.subr.mxu0 0.0
      %1031 = vmatpush1.msra.mxu0 0.0
      %1032 = vmatprep.subr.mxu0 0.0
      %1033 = vmatpush1.msra.mxu0 0.0
      %1034 = vmatprep.subr.mxu0 0.0
      %1035 = vmatpush1.msra.mxu0 0.0
      %1036 = vmatprep.subr.mxu0 0.0
      %1037 = vmatpush1.msra.mxu0 0.0
      %1038 = vmatprep.subr.mxu0 0.0
      %1039 = vmatpush1.msra.mxu0 0.0
      %1040 = vmatprep.subr.mxu0 0.0
      %1041 = vmatpush1.msra.mxu0 0.0
      %1042 = vmatprep.mubr.f32.mxu0 0.0
      %1043 = vmatmul.mubr.f32.gmra.mrb[0].mxu0 %v976
      %v1044 = vpop.f32.mrb[0].mxu0
      %v1045 = vadd.f32 %v972, %v1044
      %v1046 = vpop.f32.mrb[0].mxu0
      %v1047 = vadd.f32 %v972, %v1046
      %1048 = vdwg.mxu0
      %v1049 = vld [vmem:[%s685] sm:$0xff]
      %v1050 = vld [vmem:[%s685 + $0x8] sm:$0xff]
      %v1051 = vld [vmem:[%s11] sm:$0xff]
      %v1052 = vld [vmem:[%s11 + $0x8] sm:$0xff]
      %v1053 = vld [vmem:[%s12] sm:$0xff]
      %v1054 = vld [vmem:[%s12 + $0x8] sm:$0xff]
      %v1055 = vld [vmem:[%s13] sm:$0xff]
      %v1056 = vld [vmem:[%s13 + $0x8] sm:$0xff]
      %v1057 = vadd.f32 %v1045, %v1047
      %1058 = vadd.xlane.f32.xlu0 %v1057
      %v1059 = vpop.xlane.xlu0 %1058
      %v1060 = vadd.f32 %v1049, %v1050
      %1061 = vadd.xlane.f32.xlu0 %v1060
      %v1062 = vpop.xlane.xlu0 %1061
      %v1063 = vrcp.pop 256.0
      %v1064 = vmul.f32 %v1059, %v1063
      %v1065 = vmul.f32 %v1062, %v1063
      %v1066 = vmul.f32 %v1045, %v1045
      %v1067 = vmul.f32 %v1047, %v1047
      %v1068 = vmul.f32 %v1049, %v1049
      %v1069 = vmul.f32 %v1050, %v1050
      %v1070 = vadd.f32 %v1066, %v1067
      %1071 = vadd.xlane.f32.xlu0 %v1070
      %v1072 = vpop.xlane.xlu0 %1071
      %v1073 = vadd.f32 %v1068, %v1069
      %1074 = vadd.xlane.f32.xlu0 %v1073
      %v1075 = vpop.xlane.xlu0 %1074
      %v1076 = vmul.f32 %v1072, %v1063
      %v1077 = vmul.f32 %v1075, %v1063
      %vm1078 = vcmask 130048
      %v1080 = vsel %vm1078, %v1055, 0
      %v1083 = vsel %vm1078, %v1056, 0
      %1085 = vmatprep.subr.mxu0 0.0
      %1086 = vmatpush1.msra.mxu0 %v1064
      %1087 = vmatprep.subr.mxu0 0.0
      %1088 = vmatpush1.msra.mxu0 %v1065
      %1089 = vmatprep.subr.mxu0 0.0
      %1090 = vmatpush1.msra.mxu0 0.0
      %1091 = vmatprep.subr.mxu0 0.0
      %1092 = vmatpush1.msra.mxu0 0.0
      %1093 = vmatprep.subr.mxu0 0.0
      %1094 = vmatpush1.msra.mxu0 0.0
      %1095 = vmatprep.subr.mxu0 0.0
      %1096 = vmatpush1.msra.mxu0 0.0
      %1097 = vmatprep.subr.mxu0 0.0
      %1098 = vmatpush1.msra.mxu0 0.0
      %1099 = vmatprep.subr.mxu0 0.0
      %1100 = vmatpush1.msra.mxu0 0.0
      %1101 = vmatprep.subr.mxu0 0.0
      %1102 = vmatpush1.msra.mxu0 0.0
      %1103 = vmatprep.subr.mxu0 0.0
      %1104 = vmatpush1.msra.mxu0 0.0
      %1105 = vmatprep.subr.mxu0 0.0
      %1106 = vmatpush1.msra.mxu0 0.0
      %1107 = vmatprep.subr.mxu0 0.0
      %1108 = vmatpush1.msra.mxu0 0.0
      %1109 = vmatprep.subr.mxu0 0.0
      %1110 = vmatpush1.msra.mxu0 0.0
      %1111 = vmatprep.subr.mxu0 0.0
      %1112 = vmatpush1.msra.mxu0 0.0
      %1113 = vmatprep.subr.mxu0 0.0
      %1114 = vmatpush1.msra.mxu0 0.0
      %1115 = vmatprep.subr.mxu0 0.0
      %1116 = vmatpush1.msra.mxu0 0.0
      %1117 = vmatprep.subr.mxu0 0.0
      %1118 = vmatpush1.msra.mxu0 0.0
      %1119 = vmatprep.subr.mxu0 0.0
      %1120 = vmatpush1.msra.mxu0 0.0
      %1121 = vmatprep.subr.mxu0 0.0
      %1122 = vmatpush1.msra.mxu0 0.0
      %1123 = vmatprep.subr.mxu0 0.0
      %1124 = vmatpush1.msra.mxu0 0.0
      %1125 = vmatprep.subr.mxu0 0.0
      %1126 = vmatpush1.msra.mxu0 0.0
      %1127 = vmatprep.subr.mxu0 0.0
      %1128 = vmatpush1.msra.mxu0 0.0
      %1129 = vmatprep.subr.mxu0 0.0
      %1130 = vmatpush1.msra.mxu0 0.0
      %1131 = vmatprep.subr.mxu0 0.0
      %1132 = vmatpush1.msra.mxu0 0.0
      %1133 = vmatprep.subr.mxu0 0.0
      %1134 = vmatpush1.msra.mxu0 0.0
      %1135 = vmatprep.subr.mxu0 0.0
      %1136 = vmatpush1.msra.mxu0 0.0
      %1137 = vmatprep.subr.mxu0 0.0
      %1138 = vmatpush1.msra.mxu0 0.0
      %1139 = vmatprep.subr.mxu0 0.0
      %1140 = vmatpush1.msra.mxu0 0.0
      %1141 = vmatprep.subr.mxu0 0.0
      %1142 = vmatpush1.msra.mxu0 0.0
      %1143 = vmatprep.subr.mxu0 0.0
      %1144 = vmatpush1.msra.mxu0 0.0
      %1145 = vmatprep.subr.mxu0 0.0
      %1146 = vmatpush1.msra.mxu0 0.0
      %1147 = vmatprep.subr.mxu0 0.0
      %1148 = vmatpush1.msra.mxu0 0.0
      %1149 = vmatprep.mubr.f32.mxu0 0.0
      %1150 = vmatmul.mubr.f32.gmra.mrb[0].mxu0 %v1080
      %v1151 = vpop.f32.mrb[0].mxu0
      %v1152 = vadd.f32 0.0, %v1151
      %v1153 = vpop.f32.mrb[0].mxu0
      %1154 = vmatprep.mubr.f32.mxu0 0.0
      %1155 = vmatmul.mubr.f32.gmra.mrb[0].mxu0 %v1083
      %v1156 = vpop.f32.mrb[0].mxu0
      %v1157 = vadd.f32 0.0, %v1156
      %v1158 = vpop.f32.mrb[0].mxu0
      %1159 = vdwg.mxu0
      %1160 = vmatprep.subr.mxu0 0.0
      %1161 = vmatpush1.msra.mxu0 %v1076
      %1162 = vmatprep.subr.mxu0 0.0
      %1163 = vmatpush1.msra.mxu0 %v1077
      %1164 = vmatprep.subr.mxu0 0.0
      %1165 = vmatpush1.msra.mxu0 0.0
      %1166 = vmatprep.subr.mxu0 0.0
      %1167 = vmatpush1.msra.mxu0 0.0
      %1168 = vmatprep.subr.mxu0 0.0
      %1169 = vmatpush1.msra.mxu0 0.0
      %1170 = vmatprep.subr.mxu0 0.0
      %1171 = vmatpush1.msra.mxu0 0.0
      %1172 = vmatprep.subr.mxu0 0.0
      %1173 = vmatpush1.msra.mxu0 0.0
      %1174 = vmatprep.subr.mxu0 0.0
      %1175 = vmatpush1.msra.mxu0 0.0
      %1176 = vmatprep.subr.mxu0 0.0
      %1177 = vmatpush1.msra.mxu0 0.0
      %1178 = vmatprep.subr.mxu0 0.0
      %1179 = vmatpush1.msra.mxu0 0.0
      %1180 = vmatprep.subr.mxu0 0.0
      %1181 = vmatpush1.msra.mxu0 0.0
      %1182 = vmatprep.subr.mxu0 0.0
      %1183 = vmatpush1.msra.mxu0 0.0
      %1184 = vmatprep.subr.mxu0 0.0
      %1185 = vmatpush1.msra.mxu0 0.0
      %1186 = vmatprep.subr.mxu0 0.0
      %1187 = vmatpush1.msra.mxu0 0.0
      %1188 = vmatprep.subr.mxu0 0.0
      %1189 = vmatpush1.msra.mxu0 0.0
      %1190 = vmatprep.subr.mxu0 0.0
      %1191 = vmatpush1.msra.mxu0 0.0
      %1192 = vmatprep.subr.mxu0 0.0
      %1193 = vmatpush1.msra.mxu0 0.0
      %1194 = vmatprep.subr.mxu0 0.0
      %1195 = vmatpush1.msra.mxu0 0.0
      %1196 = vmatprep.subr.mxu0 0.0
      %1197 = vmatpush1.msra.mxu0 0.0
      %1198 = vmatprep.subr.mxu0 0.0
      %1199 = vmatpush1.msra.mxu0 0.0
      %1200 = vmatprep.subr.mxu0 0.0
      %1201 = vmatpush1.msra.mxu0 0.0
      %1202 = vmatprep.subr.mxu0 0.0
      %1203 = vmatpush1.msra.mxu0 0.0
      %1204 = vmatprep.subr.mxu0 0.0
      %1205 = vmatpush1.msra.mxu0 0.0
      %1206 = vmatprep.subr.mxu0 0.0
      %1207 = vmatpush1.msra.mxu0 0.0
      %1208 = vmatprep.subr.mxu0 0.0
      %1209 = vmatpush1.msra.mxu0 0.0
      %1210 = vmatprep.subr.mxu0 0.0
      %1211 = vmatpush1.msra.mxu0 0.0
      %1212 = vmatprep.subr.mxu0 0.0
      %1213 = vmatpush1.msra.mxu0 0.0
      %1214 = vmatprep.subr.mxu0 0.0
      %1215 = vmatpush1.msra.mxu0 0.0
      %1216 = vmatprep.subr.mxu0 0.0
      %1217 = vmatpush1.msra.mxu0 0.0
      %1218 = vmatprep.subr.mxu0 0.0
      %1219 = vmatpush1.msra.mxu0 0.0
      %1220 = vmatprep.subr.mxu0 0.0
      %1221 = vmatpush1.msra.mxu0 0.0
      %1222 = vmatprep.subr.mxu0 0.0
      %1223 = vmatpush1.msra.mxu0 0.0
      %1224 = vmatprep.mubr.f32.mxu0 0.0
      %1225 = vmatmul.mubr.f32.gmra.mrb[0].mxu0 %v1080
      %v1226 = vpop.f32.mrb[0].mxu0
      %v1227 = vadd.f32 0.0, %v1226
      %v1228 = vpop.f32.mrb[0].mxu0
      %1229 = vmatprep.mubr.f32.mxu0 0.0
      %1230 = vmatmul.mubr.f32.gmra.mrb[0].mxu0 %v1083
      %v1231 = vpop.f32.mrb[0].mxu0
      %v1232 = vadd.f32 0.0, %v1231
      %v1233 = vpop.f32.mrb[0].mxu0
      %1234 = vdwg.mxu0
      %v1235 = vmul.f32 %v1152, %v1152
      %v1236 = vmul.f32 %v1157, %v1157
      %v1237 = vsub.f32 %v1227, %v1235
      %v1238 = vsub.f32 %v1232, %v1236
      %v1239 = vmax.f32 %v1237, 0.0
      %v1240 = vmax.f32 %v1238, 0.0
      %1242 = vset.pattern.permute.xlu0 0
      %1243 = vperm.xlu0 %1242, %v1152
      %v1244 = vpop.permute.xlu0 %1243
      %1247 = vset.pattern.permute.xlu0 0
      %1248 = vperm.xlu0 %1247, %v1157
      %v1249 = vpop.permute.xlu0 %1248
      %v1251 = vsub.f32 %v1045, %v1244
      %v1252 = vsub.f32 %v1047, %v1244
      %v1253 = vsub.f32 %v1049, %v1249
      %v1254 = vsub.f32 %v1050, %v1249
      %v1255 = vadd.f32 %v1239, 1e-05
      %v1256 = vadd.f32 %v1240, 1e-05
      %v1257 = vrsqrt.pop %v1255
      %v1258 = vrsqrt.pop %v1256
      %v1259 = vmul.f32 %v1257, %v1051
      %v1260 = vmul.f32 %v1258, %v1052
      %1262 = vset.pattern.permute.xlu0 0
      %1263 = vperm.xlu0 %1262, %v1259
      %v1264 = vpop.permute.xlu0 %1263
      %1267 = vset.pattern.permute.xlu0 0
      %1268 = vperm.xlu0 %1267, %v1260
      %v1269 = vpop.permute.xlu0 %1268
      %v1271 = vmul.f32 %v1251, %v1264
      %v1272 = vmul.f32 %v1252, %v1264
      %v1273 = vmul.f32 %v1253, %v1269
      %v1274 = vmul.f32 %v1254, %v1269
      %1276 = vset.pattern.permute.xlu0 0
      %1277 = vperm.xlu0 %1276, %v1053
      %v1278 = vpop.permute.xlu0 %1277
      %1281 = vset.pattern.permute.xlu0 0
      %1282 = vperm.xlu0 %1281, %v1054
      %v1283 = vpop.permute.xlu0 %1282
      %v1285 = vadd.f32 %v1271, %v1278
      %v1286 = vadd.f32 %v1272, %v1278
      %v1287 = vadd.f32 %v1273, %v1283
      %v1288 = vadd.f32 %v1274, %v1283
      %v1289 = vxor.u32 %v1285, 2147483648
      %v1290 = vxor.u32 %v1286, 2147483648
      %v1291 = vxor.u32 %v1287, 2147483648
      %v1292 = vxor.u32 %v1288, 2147483648
      %v1293 = vmul.f32 %v1289, 1.442695
      %v1294 = vpow.pop %v1293
      %v1295 = vmul.f32 %v1290, 1.442695
      %v1296 = vpow.pop %v1295
      %v1297 = vmul.f32 %v1291, 1.442695
      %v1298 = vpow.pop %v1297
      %v1299 = vmul.f32 %v1292, 1.442695
      %v1300 = vpow.pop %v1299
      %v1301 = vadd.f32 %v1294, 1.0
      %v1302 = vadd.f32 %v1296, 1.0
      %v1303 = vadd.f32 %v1298, 1.0
      %v1304 = vadd.f32 %v1300, 1.0
      %v1305 = vrcp.pop %v1301
      %v1306 = vmul.f32 1.0, %v1305
      %v1307 = vrcp.pop %v1302
      %v1308 = vmul.f32 1.0, %v1307
      %v1309 = vrcp.pop %v1303
      %v1310 = vmul.f32 1.0, %v1309
      %v1311 = vrcp.pop %v1304
      %v1312 = vmul.f32 1.0, %v1311
      %v1313 = vmul.f32 %v1285, %v1306
      %v1314 = vmul.f32 %v1286, %v1308
      %v1315 = vmul.f32 %v1287, %v1310
      %v1316 = vmul.f32 %v1288, %v1312
      %v1317 = vld [vmem:[%s14] sm:$0xff]
      %v1318 = vld [vmem:[%s14 + $0x8] sm:$0xff]
      %v1319 = vld [vmem:[%s15] sm:$0xff]
      %1320 = vrot.lane.b32.xlu0 %v1313, 17
      %v1321 = vpop.permute.xlu0 %1320
      %1322 = vrot.lane.b32.xlu0 %v1315, 17
      %v1323 = vpop.permute.xlu0 %1322
      %1324 = vrot.lane.b32.xlu0 %v1314, 17
      %v1325 = vpop.permute.xlu0 %1324
      %1326 = vrot.lane.b32.xlu0 %v1316, 17
      %v1327 = vpop.permute.xlu0 %1326
      %v1328 = vsel %vm837, %v1321, %v1325
      %v1329 = vsel %vm837, %v1323, %v1327
      %v1330 = vsel %vm837, %v1325, %v1321
      %v1331 = vsel %vm837, %v1327, %v1323
      %v1332 = vmul.f32 %v1330, %v843
      %v1333 = vmul.f32 %v1328, %v847
      %v1334 = vmul.f32 %v1331, %v843
      %v1335 = vmul.f32 %v1329, %v847
      %1336 = vrot.lane.b32.xlu0 %v1313, 16
      %v1337 = vpop.permute.xlu0 %1336
      %1338 = vrot.lane.b32.xlu0 %v1315, 16
      %v1339 = vpop.permute.xlu0 %1338
      %1340 = vrot.lane.b32.xlu0 %v1314, 16
      %v1341 = vpop.permute.xlu0 %1340
      %1342 = vrot.lane.b32.xlu0 %v1316, 16
      %v1343 = vpop.permute.xlu0 %1342
      %v1344 = vsel %vm854, %v1337, %v1341
      %v1345 = vsel %vm854, %v1339, %v1343
      %v1346 = vsel %vm854, %v1341, %v1337
      %v1347 = vsel %vm854, %v1343, %v1339
      %v1348 = vmul.f32 %v1346, %v860
      %v1349 = vmul.f32 %v1344, %v864
      %v1350 = vmul.f32 %v1347, %v860
      %v1351 = vmul.f32 %v1345, %v864
      %1352 = vrot.lane.b32.xlu0 %v1313, 15
      %v1353 = vpop.permute.xlu0 %1352
      %1354 = vrot.lane.b32.xlu0 %v1315, 15
      %v1355 = vpop.permute.xlu0 %1354
      %1356 = vrot.lane.b32.xlu0 %v1314, 15
      %v1357 = vpop.permute.xlu0 %1356
      %1358 = vrot.lane.b32.xlu0 %v1316, 15
      %v1359 = vpop.permute.xlu0 %1358
      %v1360 = vsel %vm871, %v1353, %v1357
      %v1361 = vsel %vm871, %v1355, %v1359
      %v1362 = vsel %vm871, %v1357, %v1353
      %v1363 = vsel %vm871, %v1359, %v1355
      %v1364 = vmul.f32 %v1362, %v877
      %v1365 = vmul.f32 %v1360, %v881
      %v1366 = vmul.f32 %v1363, %v877
      %v1367 = vmul.f32 %v1361, %v881
      %1368 = vrot.lane.b32.xlu0 %v1313, 1
      %v1369 = vpop.permute.xlu0 %1368
      %1370 = vrot.lane.b32.xlu0 %v1315, 1
      %v1371 = vpop.permute.xlu0 %1370
      %1372 = vrot.lane.b32.xlu0 %v1314, 1
      %v1373 = vpop.permute.xlu0 %1372
      %1374 = vrot.lane.b32.xlu0 %v1316, 1
      %v1375 = vpop.permute.xlu0 %1374
      %v1376 = vsel %vm888, %v1369, %v1373
      %v1377 = vsel %vm888, %v1371, %v1375
      %v1378 = vsel %vm888, %v1373, %v1369
      %v1379 = vsel %vm888, %v1375, %v1371
      %v1380 = vmul.f32 %v1378, %v894
      %v1381 = vmul.f32 %v1376, %v898
      %v1382 = vmul.f32 %v1379, %v894
      %v1383 = vmul.f32 %v1377, %v898
      %1384 = vrot.lane.b32.xlu0 %v1313, 127
      %v1385 = vpop.permute.xlu0 %1384
      %1386 = vrot.lane.b32.xlu0 %v1315, 127
      %v1387 = vpop.permute.xlu0 %1386
      %1388 = vrot.lane.b32.xlu0 %v1314, 127
      %v1389 = vpop.permute.xlu0 %1388
      %1390 = vrot.lane.b32.xlu0 %v1316, 127
      %v1391 = vpop.permute.xlu0 %1390
      %v1392 = vsel %vm905, %v1385, %v1389
      %v1393 = vsel %vm905, %v1387, %v1391
      %v1394 = vsel %vm905, %v1389, %v1385
      %v1395 = vsel %vm905, %v1391, %v1387
      %v1396 = vmul.f32 %v1392, %v911
      %v1397 = vmul.f32 %v1394, %v915
      %v1398 = vmul.f32 %v1393, %v911
      %v1399 = vmul.f32 %v1395, %v915
      %1400 = vrot.lane.b32.xlu0 %v1313, 113
      %v1401 = vpop.permute.xlu0 %1400
      %1402 = vrot.lane.b32.xlu0 %v1315, 113
      %v1403 = vpop.permute.xlu0 %1402
      %1404 = vrot.lane.b32.xlu0 %v1314, 113
      %v1405 = vpop.permute.xlu0 %1404
      %1406 = vrot.lane.b32.xlu0 %v1316, 113
      %v1407 = vpop.permute.xlu0 %1406
      %v1408 = vsel %vm922, %v1401, %v1405
      %v1409 = vsel %vm922, %v1403, %v1407
      %v1410 = vsel %vm922, %v1405, %v1401
      %v1411 = vsel %vm922, %v1407, %v1403
      %v1412 = vmul.f32 %v1408, %v928
      %v1413 = vmul.f32 %v1410, %v932
      %v1414 = vmul.f32 %v1409, %v928
      %v1415 = vmul.f32 %v1411, %v932
      %1416 = vrot.lane.b32.xlu0 %v1313, 112
      %v1417 = vpop.permute.xlu0 %1416
      %1418 = vrot.lane.b32.xlu0 %v1315, 112
      %v1419 = vpop.permute.xlu0 %1418
      %1420 = vrot.lane.b32.xlu0 %v1314, 112
      %v1421 = vpop.permute.xlu0 %1420
      %1422 = vrot.lane.b32.xlu0 %v1316, 112
      %v1423 = vpop.permute.xlu0 %1422
      %v1424 = vsel %vm939, %v1417, %v1421
      %v1425 = vsel %vm939, %v1419, %v1423
      %v1426 = vsel %vm939, %v1421, %v1417
      %v1427 = vsel %vm939, %v1423, %v1419
      %v1428 = vmul.f32 %v1424, %v945
      %v1429 = vmul.f32 %v1426, %v949
      %v1430 = vmul.f32 %v1425, %v945
      %v1431 = vmul.f32 %v1427, %v949
      %1432 = vrot.lane.b32.xlu0 %v1313, 111
      %v1433 = vpop.permute.xlu0 %1432
      %1434 = vrot.lane.b32.xlu0 %v1315, 111
      %v1435 = vpop.permute.xlu0 %1434
      %1436 = vrot.lane.b32.xlu0 %v1314, 111
      %v1437 = vpop.permute.xlu0 %1436
      %1438 = vrot.lane.b32.xlu0 %v1316, 111
      %v1439 = vpop.permute.xlu0 %1438
      %v1440 = vsel %vm956, %v1433, %v1437
      %v1441 = vsel %vm956, %v1435, %v1439
      %v1442 = vsel %vm956, %v1437, %v1433
      %v1443 = vsel %vm956, %v1439, %v1435
      %v1444 = vmul.f32 %v1440, %v962
      %v1445 = vmul.f32 %v1442, %v966
      %v1446 = vmul.f32 %v1441, %v962
      %v1447 = vmul.f32 %v1443, %v966
      %1449 = vset.pattern.permute.xlu0 0
      %1450 = vperm.xlu0 %1449, %v1319
      %v1451 = vpop.permute.xlu0 %1450
      %v1454 = vsel %vm1078, %v1318, 0
      %1456 = vmatprep.subr.mxu0 %v1333
      %1457 = vmatpush1.msra.mxu0 %v1332
      %1458 = vmatprep.subr.mxu0 %v1335
      %1459 = vmatpush1.msra.mxu0 %v1334
      %1460 = vmatprep.subr.mxu0 %v1349
      %1461 = vmatpush1.msra.mxu0 %v1348
      %1462 = vmatprep.subr.mxu0 %v1351
      %1463 = vmatpush1.msra.mxu0 %v1350
      %1464 = vmatprep.subr.mxu0 %v1365
      %1465 = vmatpush1.msra.mxu0 %v1364
      %1466 = vmatprep.subr.mxu0 %v1367
      %1467 = vmatpush1.msra.mxu0 %v1366
      %1468 = vmatprep.subr.mxu0 %v1381
      %1469 = vmatpush1.msra.mxu0 %v1380
      %1470 = vmatprep.subr.mxu0 %v1383
      %1471 = vmatpush1.msra.mxu0 %v1382
      %1472 = vmatprep.subr.mxu0 %v1314
      %1473 = vmatpush1.msra.mxu0 %v1313
      %1474 = vmatprep.subr.mxu0 %v1316
      %1475 = vmatpush1.msra.mxu0 %v1315
      %1476 = vmatprep.subr.mxu0 %v1397
      %1477 = vmatpush1.msra.mxu0 %v1396
      %1478 = vmatprep.subr.mxu0 %v1399
      %1479 = vmatpush1.msra.mxu0 %v1398
      %1480 = vmatprep.subr.mxu0 %v1413
      %1481 = vmatpush1.msra.mxu0 %v1412
      %1482 = vmatprep.subr.mxu0 %v1415
      %1483 = vmatpush1.msra.mxu0 %v1414
      %1484 = vmatprep.subr.mxu0 %v1429
      %1485 = vmatpush1.msra.mxu0 %v1428
      %1486 = vmatprep.subr.mxu0 %v1431
      %1487 = vmatpush1.msra.mxu0 %v1430
      %1488 = vmatprep.subr.mxu0 %v1445
      %1489 = vmatpush1.msra.mxu0 %v1444
      %1490 = vmatprep.subr.mxu0 %v1447
      %1491 = vmatpush1.msra.mxu0 %v1446
      %1492 = vmatprep.subr.mxu0 0.0
      %1493 = vmatpush1.msra.mxu0 0.0
      %1494 = vmatprep.subr.mxu0 0.0
      %1495 = vmatpush1.msra.mxu0 0.0
      %1496 = vmatprep.subr.mxu0 0.0
      %1497 = vmatpush1.msra.mxu0 0.0
      %1498 = vmatprep.subr.mxu0 0.0
      %1499 = vmatpush1.msra.mxu0 0.0
      %1500 = vmatprep.subr.mxu0 0.0
      %1501 = vmatpush1.msra.mxu0 0.0
      %1502 = vmatprep.subr.mxu0 0.0
      %1503 = vmatpush1.msra.mxu0 0.0
      %1504 = vmatprep.subr.mxu0 0.0
      %1505 = vmatpush1.msra.mxu0 0.0
      %1506 = vmatprep.subr.mxu0 0.0
      %1507 = vmatpush1.msra.mxu0 0.0
      %1508 = vmatprep.subr.mxu0 0.0
      %1509 = vmatpush1.msra.mxu0 0.0
      %1510 = vmatprep.subr.mxu0 0.0
      %1511 = vmatpush1.msra.mxu0 0.0
      %1512 = vmatprep.subr.mxu0 0.0
      %1513 = vmatpush1.msra.mxu0 0.0
      %1514 = vmatprep.subr.mxu0 0.0
      %1515 = vmatpush1.msra.mxu0 0.0
      %1516 = vmatprep.subr.mxu0 0.0
      %1517 = vmatpush1.msra.mxu0 0.0
      %1518 = vmatprep.subr.mxu0 0.0
      %1519 = vmatpush1.msra.mxu0 0.0
      %1520 = vmatprep.mubr.f32.mxu0 %v1454
      %1521 = vmatmul.mubr.f32.gmra.mrb[0].mxu0 %v1317
      %v1522 = vpop.f32.mrb[0].mxu0
      %v1523 = vadd.f32 %v1451, %v1522
      %v1524 = vpop.f32.mrb[0].mxu0
      %v1525 = vadd.f32 %v1451, %v1524
      %1526 = vdwg.mxu0
      %v1527 = vld [vmem:[%s16] sm:$0xff]
      %v1528 = vld [vmem:[%s17] sm:$0xff]
      %v1529 = vld [vmem:[%s18] sm:$0xff]
      %v1530 = vadd.f32 %v1523, %v1525
      %1531 = vadd.xlane.f32.xlu0 %v1530
      %v1532 = vpop.xlane.xlu0 %1531
      %v1533 = vmul.f32 %v1532, %v1063
      %v1534 = vmul.f32 %v1523, %v1523
      %v1535 = vmul.f32 %v1525, %v1525
      %v1536 = vadd.f32 %v1534, %v1535
      %1537 = vadd.xlane.f32.xlu0 %v1536
      %v1538 = vpop.xlane.xlu0 %1537
      %v1539 = vmul.f32 %v1538, %v1063
      %v1541 = vsel %vm703, %v1529, 0
      %1543 = vmatprep.subr.mxu0 0.0
      %1544 = vmatpush1.msra.mxu0 %v1533
      %1545 = vmatprep.subr.mxu0 0.0
      %1546 = vmatpush1.msra.mxu0 0.0
      %1547 = vmatprep.subr.mxu0 0.0
      %1548 = vmatpush1.msra.mxu0 0.0
      %1549 = vmatprep.subr.mxu0 0.0
      %1550 = vmatpush1.msra.mxu0 0.0
      %1551 = vmatprep.subr.mxu0 0.0
      %1552 = vmatpush1.msra.mxu0 0.0
      %1553 = vmatprep.subr.mxu0 0.0
      %1554 = vmatpush1.msra.mxu0 0.0
      %1555 = vmatprep.subr.mxu0 0.0
      %1556 = vmatpush1.msra.mxu0 0.0
      %1557 = vmatprep.subr.mxu0 0.0
      %1558 = vmatpush1.msra.mxu0 0.0
      %1559 = vmatprep.subr.mxu0 0.0
      %1560 = vmatpush1.msra.mxu0 0.0
      %1561 = vmatprep.subr.mxu0 0.0
      %1562 = vmatpush1.msra.mxu0 0.0
      %1563 = vmatprep.subr.mxu0 0.0
      %1564 = vmatpush1.msra.mxu0 0.0
      %1565 = vmatprep.subr.mxu0 0.0
      %1566 = vmatpush1.msra.mxu0 0.0
      %1567 = vmatprep.subr.mxu0 0.0
      %1568 = vmatpush1.msra.mxu0 0.0
      %1569 = vmatprep.subr.mxu0 0.0
      %1570 = vmatpush1.msra.mxu0 0.0
      %1571 = vmatprep.subr.mxu0 0.0
      %1572 = vmatpush1.msra.mxu0 0.0
      %1573 = vmatprep.subr.mxu0 0.0
      %1574 = vmatpush1.msra.mxu0 0.0
      %1575 = vmatprep.subr.mxu0 0.0
      %1576 = vmatpush1.msra.mxu0 0.0
      %1577 = vmatprep.subr.mxu0 0.0
      %1578 = vmatpush1.msra.mxu0 0.0
      %1579 = vmatprep.subr.mxu0 0.0
      %1580 = vmatpush1.msra.mxu0 0.0
      %1581 = vmatprep.subr.mxu0 0.0
      %1582 = vmatpush1.msra.mxu0 0.0
      %1583 = vmatprep.subr.mxu0 0.0
      %1584 = vmatpush1.msra.mxu0 0.0
      %1585 = vmatprep.subr.mxu0 0.0
      %1586 = vmatpush1.msra.mxu0 0.0
      %1587 = vmatprep.subr.mxu0 0.0
      %1588 = vmatpush1.msra.mxu0 0.0
      %1589 = vmatprep.subr.mxu0 0.0
      %1590 = vmatpush1.msra.mxu0 0.0
      %1591 = vmatprep.subr.mxu0 0.0
      %1592 = vmatpush1.msra.mxu0 0.0
      %1593 = vmatprep.subr.mxu0 0.0
      %1594 = vmatpush1.msra.mxu0 0.0
      %1595 = vmatprep.subr.mxu0 0.0
      %1596 = vmatpush1.msra.mxu0 0.0
      %1597 = vmatprep.subr.mxu0 0.0
      %1598 = vmatpush1.msra.mxu0 0.0
      %1599 = vmatprep.subr.mxu0 0.0
      %1600 = vmatpush1.msra.mxu0 0.0
      %1601 = vmatprep.subr.mxu0 0.0
      %1602 = vmatpush1.msra.mxu0 0.0
      %1603 = vmatprep.subr.mxu0 0.0
      %1604 = vmatpush1.msra.mxu0 0.0
      %1605 = vmatprep.subr.mxu0 0.0
      %1606 = vmatpush1.msra.mxu0 0.0
      %1607 = vmatprep.mubr.f32.mxu0 0.0
      %1608 = vmatmul.mubr.f32.gmra.mrb[0].mxu0 %v1541
      %v1609 = vpop.f32.mrb[0].mxu0
      %v1610 = vadd.f32 0.0, %v1609
      %v1611 = vpop.f32.mrb[0].mxu0
      %1612 = vdwg.mxu0
      %1613 = vmatprep.subr.mxu0 0.0
      %1614 = vmatpush1.msra.mxu0 %v1539
      %1615 = vmatprep.subr.mxu0 0.0
      %1616 = vmatpush1.msra.mxu0 0.0
      %1617 = vmatprep.subr.mxu0 0.0
      %1618 = vmatpush1.msra.mxu0 0.0
      %1619 = vmatprep.subr.mxu0 0.0
      %1620 = vmatpush1.msra.mxu0 0.0
      %1621 = vmatprep.subr.mxu0 0.0
      %1622 = vmatpush1.msra.mxu0 0.0
      %1623 = vmatprep.subr.mxu0 0.0
      %1624 = vmatpush1.msra.mxu0 0.0
      %1625 = vmatprep.subr.mxu0 0.0
      %1626 = vmatpush1.msra.mxu0 0.0
      %1627 = vmatprep.subr.mxu0 0.0
      %1628 = vmatpush1.msra.mxu0 0.0
      %1629 = vmatprep.subr.mxu0 0.0
      %1630 = vmatpush1.msra.mxu0 0.0
      %1631 = vmatprep.subr.mxu0 0.0
      %1632 = vmatpush1.msra.mxu0 0.0
      %1633 = vmatprep.subr.mxu0 0.0
      %1634 = vmatpush1.msra.mxu0 0.0
      %1635 = vmatprep.subr.mxu0 0.0
      %1636 = vmatpush1.msra.mxu0 0.0
      %1637 = vmatprep.subr.mxu0 0.0
      %1638 = vmatpush1.msra.mxu0 0.0
      %1639 = vmatprep.subr.mxu0 0.0
      %1640 = vmatpush1.msra.mxu0 0.0
      %1641 = vmatprep.subr.mxu0 0.0
      %1642 = vmatpush1.msra.mxu0 0.0
      %1643 = vmatprep.subr.mxu0 0.0
      %1644 = vmatpush1.msra.mxu0 0.0
      %1645 = vmatprep.subr.mxu0 0.0
      %1646 = vmatpush1.msra.mxu0 0.0
      %1647 = vmatprep.subr.mxu0 0.0
      %1648 = vmatpush1.msra.mxu0 0.0
      %1649 = vmatprep.subr.mxu0 0.0
      %1650 = vmatpush1.msra.mxu0 0.0
      %1651 = vmatprep.subr.mxu0 0.0
      %1652 = vmatpush1.msra.mxu0 0.0
      %1653 = vmatprep.subr.mxu0 0.0
      %1654 = vmatpush1.msra.mxu0 0.0
      %1655 = vmatprep.subr.mxu0 0.0
      %1656 = vmatpush1.msra.mxu0 0.0
      %1657 = vmatprep.subr.mxu0 0.0
      %1658 = vmatpush1.msra.mxu0 0.0
      %1659 = vmatprep.subr.mxu0 0.0
      %1660 = vmatpush1.msra.mxu0 0.0
      %1661 = vmatprep.subr.mxu0 0.0
      %1662 = vmatpush1.msra.mxu0 0.0
      %1663 = vmatprep.subr.mxu0 0.0
      %1664 = vmatpush1.msra.mxu0 0.0
      %1665 = vmatprep.subr.mxu0 0.0
      %1666 = vmatpush1.msra.mxu0 0.0
      %1667 = vmatprep.subr.mxu0 0.0
      %1668 = vmatpush1.msra.mxu0 0.0
      %1669 = vmatprep.subr.mxu0 0.0
      %1670 = vmatpush1.msra.mxu0 0.0
      %1671 = vmatprep.subr.mxu0 0.0
      %1672 = vmatpush1.msra.mxu0 0.0
      %1673 = vmatprep.subr.mxu0 0.0
      %1674 = vmatpush1.msra.mxu0 0.0
      %1675 = vmatprep.subr.mxu0 0.0
      %1676 = vmatpush1.msra.mxu0 0.0
      %1677 = vmatprep.mubr.f32.mxu0 0.0
      %1678 = vmatmul.mubr.f32.gmra.mrb[0].mxu0 %v1541
      %v1679 = vpop.f32.mrb[0].mxu0
      %v1680 = vadd.f32 0.0, %v1679
      %v1681 = vpop.f32.mrb[0].mxu0
      %1682 = vdwg.mxu0
      %v1683 = vmul.f32 %v1610, %v1610
      %v1684 = vsub.f32 %v1680, %v1683
      %v1685 = vmax.f32 %v1684, 0.0
      %1687 = vset.pattern.permute.xlu0 0
      %1688 = vperm.xlu0 %1687, %v1610
      %v1689 = vpop.permute.xlu0 %1688
      %v1691 = vsub.f32 %v1523, %v1689
      %v1692 = vsub.f32 %v1525, %v1689
      %v1693 = vadd.f32 %v1685, 1e-05
      %v1694 = vrsqrt.pop %v1693
      %v1695 = vmul.f32 %v1694, %v1527
      %1697 = vset.pattern.permute.xlu0 0
      %1698 = vperm.xlu0 %1697, %v1695
      %v1699 = vpop.permute.xlu0 %1698
      %v1701 = vmul.f32 %v1691, %v1699
      %v1702 = vmul.f32 %v1692, %v1699
      %1704 = vset.pattern.permute.xlu0 0
      %1705 = vperm.xlu0 %1704, %v1528
      %v1706 = vpop.permute.xlu0 %1705
      %v1708 = vadd.f32 %v1701, %v1706
      %v1709 = vadd.f32 %v1702, %v1706
      %v1710 = vxor.u32 %v1708, 2147483648
      %v1711 = vxor.u32 %v1709, 2147483648
      %v1712 = vmul.f32 %v1710, 1.442695
      %v1713 = vpow.pop %v1712
      %v1714 = vmul.f32 %v1711, 1.442695
      %v1715 = vpow.pop %v1714
      %v1716 = vadd.f32 %v1713, 1.0
      %v1717 = vadd.f32 %v1715, 1.0
      %v1718 = vrcp.pop %v1716
      %v1719 = vmul.f32 1.0, %v1718
      %v1720 = vrcp.pop %v1717
      %v1721 = vmul.f32 1.0, %v1720
      %v1722 = vmul.f32 %v1708, %v1719
      %v1723 = vmul.f32 %v1709, %v1721
      %v1724 = vld [vmem:[%s19] sm:$0xff]
      %v1725 = vld [vmem:[%s20] sm:$0xff]
      %1726 = vrot.lane.b32.xlu0 %v1722, 17
      %v1727 = vpop.permute.xlu0 %1726
      %1728 = vrot.lane.b32.xlu0 %v1723, 17
      %v1729 = vpop.permute.xlu0 %1728
      %v1730 = vsel %vm837, %v1727, %v1729
      %v1731 = vsel %vm837, %v1729, %v1727
      %v1732 = vmul.f32 %v1731, %v843
      %v1733 = vmul.f32 %v1730, %v847
      %1734 = vrot.lane.b32.xlu0 %v1722, 16
      %v1735 = vpop.permute.xlu0 %1734
      %1736 = vrot.lane.b32.xlu0 %v1723, 16
      %v1737 = vpop.permute.xlu0 %1736
      %v1738 = vsel %vm854, %v1735, %v1737
      %v1739 = vsel %vm854, %v1737, %v1735
      %v1740 = vmul.f32 %v1739, %v860
      %v1741 = vmul.f32 %v1738, %v864
      %1742 = vrot.lane.b32.xlu0 %v1722, 15
      %v1743 = vpop.permute.xlu0 %1742
      %1744 = vrot.lane.b32.xlu0 %v1723, 15
      %v1745 = vpop.permute.xlu0 %1744
      %v1746 = vsel %vm871, %v1743, %v1745
      %v1747 = vsel %vm871, %v1745, %v1743
      %v1748 = vmul.f32 %v1747, %v877
      %v1749 = vmul.f32 %v1746, %v881
      %1750 = vrot.lane.b32.xlu0 %v1722, 1
      %v1751 = vpop.permute.xlu0 %1750
      %1752 = vrot.lane.b32.xlu0 %v1723, 1
      %v1753 = vpop.permute.xlu0 %1752
      %v1754 = vsel %vm888, %v1751, %v1753
      %v1755 = vsel %vm888, %v1753, %v1751
      %v1756 = vmul.f32 %v1755, %v894
      %v1757 = vmul.f32 %v1754, %v898
      %1758 = vrot.lane.b32.xlu0 %v1722, 127
      %v1759 = vpop.permute.xlu0 %1758
      %1760 = vrot.lane.b32.xlu0 %v1723, 127
      %v1761 = vpop.permute.xlu0 %1760
      %v1762 = vsel %vm905, %v1759, %v1761
      %v1763 = vsel %vm905, %v1761, %v1759
      %v1764 = vmul.f32 %v1762, %v911
      %v1765 = vmul.f32 %v1763, %v915
      %1766 = vrot.lane.b32.xlu0 %v1722, 113
      %v1767 = vpop.permute.xlu0 %1766
      %1768 = vrot.lane.b32.xlu0 %v1723, 113
      %v1769 = vpop.permute.xlu0 %1768
      %v1770 = vsel %vm922, %v1767, %v1769
      %v1771 = vsel %vm922, %v1769, %v1767
      %v1772 = vmul.f32 %v1770, %v928
      %v1773 = vmul.f32 %v1771, %v932
      %1774 = vrot.lane.b32.xlu0 %v1722, 112
      %v1775 = vpop.permute.xlu0 %1774
      %1776 = vrot.lane.b32.xlu0 %v1723, 112
      %v1777 = vpop.permute.xlu0 %1776
      %v1778 = vsel %vm939, %v1775, %v1777
      %v1779 = vsel %vm939, %v1777, %v1775
      %v1780 = vmul.f32 %v1778, %v945
      %v1781 = vmul.f32 %v1779, %v949
      %1782 = vrot.lane.b32.xlu0 %v1722, 111
      %v1783 = vpop.permute.xlu0 %1782
      %1784 = vrot.lane.b32.xlu0 %v1723, 111
      %v1785 = vpop.permute.xlu0 %1784
      %v1786 = vsel %vm956, %v1783, %v1785
      %v1787 = vsel %vm956, %v1785, %v1783
      %v1788 = vmul.f32 %v1786, %v962
      %v1789 = vmul.f32 %v1787, %v966
      %1791 = vset.pattern.permute.xlu0 0
      %1792 = vperm.xlu0 %1791, %v1725
      %v1793 = vpop.permute.xlu0 %1792
      %v1796 = vsel %vm974, %v1724, 0
      %1798 = vmatprep.subr.mxu0 %v1733
      %1799 = vmatpush1.msra.mxu0 %v1732
      %1800 = vmatprep.subr.mxu0 %v1741
      %1801 = vmatpush1.msra.mxu0 %v1740
      %1802 = vmatprep.subr.mxu0 %v1749
      %1803 = vmatpush1.msra.mxu0 %v1748
      %1804 = vmatprep.subr.mxu0 %v1757
      %1805 = vmatpush1.msra.mxu0 %v1756
      %1806 = vmatprep.subr.mxu0 %v1723
      %1807 = vmatpush1.msra.mxu0 %v1722
      %1808 = vmatprep.subr.mxu0 %v1765
      %1809 = vmatpush1.msra.mxu0 %v1764
      %1810 = vmatprep.subr.mxu0 %v1773
      %1811 = vmatpush1.msra.mxu0 %v1772
      %1812 = vmatprep.subr.mxu0 %v1781
      %1813 = vmatpush1.msra.mxu0 %v1780
      %1814 = vmatprep.subr.mxu0 %v1789
      %1815 = vmatpush1.msra.mxu0 %v1788
      %1816 = vmatprep.subr.mxu0 0.0
      %1817 = vmatpush1.msra.mxu0 0.0
      %1818 = vmatprep.subr.mxu0 0.0
      %1819 = vmatpush1.msra.mxu0 0.0
      %1820 = vmatprep.subr.mxu0 0.0
      %1821 = vmatpush1.msra.mxu0 0.0
      %1822 = vmatprep.subr.mxu0 0.0
      %1823 = vmatpush1.msra.mxu0 0.0
      %1824 = vmatprep.subr.mxu0 0.0
      %1825 = vmatpush1.msra.mxu0 0.0
      %1826 = vmatprep.subr.mxu0 0.0
      %1827 = vmatpush1.msra.mxu0 0.0
      %1828 = vmatprep.subr.mxu0 0.0
      %1829 = vmatpush1.msra.mxu0 0.0
      %1830 = vmatprep.subr.mxu0 0.0
      %1831 = vmatpush1.msra.mxu0 0.0
      %1832 = vmatprep.subr.mxu0 0.0
      %1833 = vmatpush1.msra.mxu0 0.0
      %1834 = vmatprep.subr.mxu0 0.0
      %1835 = vmatpush1.msra.mxu0 0.0
      %1836 = vmatprep.subr.mxu0 0.0
      %1837 = vmatpush1.msra.mxu0 0.0
      %1838 = vmatprep.subr.mxu0 0.0
      %1839 = vmatpush1.msra.mxu0 0.0
      %1840 = vmatprep.subr.mxu0 0.0
      %1841 = vmatpush1.msra.mxu0 0.0
      %1842 = vmatprep.subr.mxu0 0.0
      %1843 = vmatpush1.msra.mxu0 0.0
      %1844 = vmatprep.subr.mxu0 0.0
      %1845 = vmatpush1.msra.mxu0 0.0
      %1846 = vmatprep.subr.mxu0 0.0
      %1847 = vmatpush1.msra.mxu0 0.0
      %1848 = vmatprep.subr.mxu0 0.0
      %1849 = vmatpush1.msra.mxu0 0.0
      %1850 = vmatprep.subr.mxu0 0.0
      %1851 = vmatpush1.msra.mxu0 0.0
      %1852 = vmatprep.subr.mxu0 0.0
      %1853 = vmatpush1.msra.mxu0 0.0
      %1854 = vmatprep.subr.mxu0 0.0
      %1855 = vmatpush1.msra.mxu0 0.0
      %1856 = vmatprep.subr.mxu0 0.0
      %1857 = vmatpush1.msra.mxu0 0.0
      %1858 = vmatprep.subr.mxu0 0.0
      %1859 = vmatpush1.msra.mxu0 0.0
      %1860 = vmatprep.subr.mxu0 0.0
      %1861 = vmatpush1.msra.mxu0 0.0
      %1862 = vmatprep.mubr.f32.mxu0 0.0
      %1863 = vmatmul.mubr.f32.gmra.mrb[0].mxu0 %v1796
      %v1864 = vpop.f32.mrb[0].mxu0
      %v1865 = vadd.f32 %v1793, %v1864
      %v1866 = vpop.f32.mrb[0].mxu0
      %v1867 = vadd.f32 %v1793, %v1866
      %1868 = vdwg.mxu0
      %v1869 = vadd.f32 %v1865, %v1523
      %v1870 = vadd.f32 %v1867, %v1525
      %1871 = vst [vmem:[%s690] sm:$0xff] %v1869
      %1872 = vst [vmem:[%s690 + $0x8] sm:$0xff] %v1870
      %p1873 = scmp.lt.s32.totalorder %s32, 1
      %s1874 = scalar_select %p1873, %s32, 1
      %s1875 = smul.addr %s1874, 2
      %s1876 = smul.addr %s1875, 8
      %s1877 = scalar_lea.vmem %s21, %s1876
      // Predicated region
      $region105: #{up_block2_forward.1} parent=103 // pred_check
        %p1878 = pneg %p506
      $region106: #{up_block2_forward.1} parent=103 // pred_check_branch
        %1880 = sbr.rel (%p1878) target = $region108
      $region107: #{up_block2_forward.1} parent=103 // pred_region
        _
      $region108: #{up_block2_forward.1} parent=103 // pred_fallthru
        _
    $region104: #{up_block2_forward.1} parent=5 // pred_fallthru
      _
    %p1881 = scmp.le.s32.totalorder 2, %s27
    // Predicated region
    $region109: #{up_block2_forward.1} parent=5 // pred_check
      %p1882 = pneg %p1881
    $region110: #{up_block2_forward.1} parent=5 // pred_check_branch
      %1884 = sbr.rel (%p1882) target = $region112
    $region111: #{up_block2_forward.1} parent=5 // pred_region
      %s1885 = ssub.s32 %s27, 2
      // Predicated region
      $region113: #{up_block2_forward.1} parent=111 // pred_check
        %p1886 = pneg %p512
      $region114: #{up_block2_forward.1} parent=111 // pred_check_branch
        %1888 = sbr.rel (%p1886) target = $region116
      $region115: #{up_block2_forward.1} parent=111 // pred_region
        %p1889 = scmp.lt.s32.totalorder %s33, 1
        %s1890 = scalar_select %p1889, %s33, 1
        %s1891 = smul.addr %s1890, 2
        %s1892 = smul.addr %s1891, 8
        %s1893 = scalar_lea.vmem %s21, %s1892
      $region116: #{up_block2_forward.1} parent=111 // pred_fallthru
        _
    $region112: #{up_block2_forward.1} parent=5 // pred_fallthru
      _
  $region6: #{up_block2_forward.1} parent=0 // loop_footer
    %s31 = sadd.s32 1, %s27
  $region7: #{up_block2_forward.1} parent=0 // loop_footer_branch
    %26 = sbr.rel target = $region3
  $region8: #{up_block2_forward.1} parent=0 // loop_exit
    _

</llo_original>
